<compile_context>
chip_gen: v7x
topology: tpu7x:2x2x1
jax: 0.10.0
libtpu: 0.0.40
codegen_flags: <defaults>
</compile_context>

<pallas_src>
import jax
import jax.numpy as jnp
from jax import lax
from jax.experimental import pallas as pl
from jax.experimental.pallas import tpu as pltpu


def _upconv_kernel(xpad_ref, w_ref, y_ref, stats_ref):
    """Fused nearest-2x-upsample + 3x3 conv + streamed BN statistics.

    xpad_ref:  (H+2, W+2, Cin)  bf16, zero-padded input image for batch n
                                (block index constant in t -> resident per n)
    w_ref:     (9*Cin, 4*Cpad)  bf16 folded upsample+conv weights
    y_ref:     (TI, W, 4*Cpad)  bf16 conv output tile (subpixel channel layout)
    stats_ref: (2, 4*Cpad)      f32 [sum, sum_sq] accumulated across row tiles
    """
    TI, W, CO4 = y_ref.shape
    Cin = xpad_ref.shape[-1]
    t = pl.program_id(1)

    # BN partial-stat accumulator lives in the (revisited) output block.
    @pl.when(t == 0)
    def _():
        stats_ref[...] = jnp.zeros_like(stats_ref)

    # Halo slab of input rows for this output row tile.
    i0 = t * TI
    if TI % 8 == 0:
        i0 = pl.multiple_of(i0, 8)
    slab = xpad_ref[pl.ds(i0, TI + 2), :, :]            # (TI+2, W+2, Cin) bf16

    # im2col -> one big-K matmul on the MXU (K = 9*Cin, N = 4*Cpad).
    pieces = []
    for da in range(3):
        for db in range(3):
            pieces.append(slab[da:da + TI, db:db + W, :].reshape(TI * W, Cin))
    patch = jnp.concatenate(pieces, axis=-1)            # (TI*W, 9*Cin) bf16

    acc = jnp.dot(patch, w_ref[...],
                  preferred_element_type=jnp.float32)   # (TI*W, 4*Cpad) f32

    # Conv output tile in bf16 (BN math stays f32 via the streamed stats).
    y_ref[...] = acc.reshape(TI, W, CO4).astype(y_ref.dtype)

    # Streamed BatchNorm statistics (f32 partial sum / sum of squares).
    ssum = jnp.sum(acc, axis=0, keepdims=True)          # (1, 4*Cpad)
    ssq = jnp.sum(acc * acc, axis=0, keepdims=True)     # (1, 4*Cpad)
    stats_ref[...] += jnp.concatenate([ssum, ssq], axis=0)


def up_conv_forward(x_nchw, params, *, eps=1e-5):
    """PyTorch-equivalent up_conv forward: NCHW in -> NCHW out (2x spatial)."""
    w = params["w"]                                     # (3,3,Cin,Cout)
    gamma, beta = params["gamma"], params["beta"]
    N, Cin, H, W = x_nchw.shape
    Cout = w.shape[-1]
    Cpad = 32 * ((Cout + 31) // 32)                     # 4*Cpad multiple of 128
    CO4 = 4 * Cpad
    K = 9 * Cin

    # Row tile: largest divisor of H with matmul M = TI*W <= 1024 (prefer >=256
    # to fill the 256-wide MXU on v6e/v7x).  Re-derive against VMEM for very
    # large W / production channel counts.
    TI = 1
    for ti in range(H, 0, -1):
        if H % ti == 0 and ti * W <= 1024:
            TI = ti
            break
    T = H // TI

    # NCHW -> NHWC, zero pad H/W by 1, cast to bf16 once (tiny fused XLA op).
    x = jnp.transpose(x_nchw, (0, 2, 3, 1)).astype(jnp.bfloat16)
    xpad = jnp.pad(x, ((0, 0), (1, 1), (1, 1), (0, 0)))  # (N, H+2, W+2, Cin)

    # --- Fold upsample(2x nearest) + 3x3 conv into one (9*Cin, 4*Cpad) matrix:
    # out[2i+pr, 2j+ps, co] = sum_{da,db,ci} xpad[i+da, j+db, ci] * w2[da,db,ci,pr,ps,co]
    # (No conv bias: it cancels exactly under train-mode BatchNorm.)
    sel = jnp.array([[[1., 0., 0.], [0., 1., 1.]],
                     [[1., 1., 0.], [0., 0., 1.]]], jnp.float32)  # [parity, tap, k]
    wsub = jnp.einsum("pad,qbe,deio->pqabio", sel, sel, w)  # (2,2,2,2,Cin,Cout)
    w2 = jnp.zeros((3, 3, Cin, 2, 2, Cpad), jnp.float32)
    for pr in range(2):
        for ps in range(2):
            for a in range(2):
                for bb in range(2):
                    w2 = w2.at[pr + a, ps + bb, :, pr, ps, :Cout].set(
                        wsub[pr, ps, a, bb])
    w2 = w2.reshape(K, CO4).astype(jnp.bfloat16)

    # --- Single Pallas pass: upsample+conv matmul with streamed BN statistics.
    y1, stats = pl.pallas_call(
        _upconv_kernel,
        grid=(N, T),
        out_shape=(jax.ShapeDtypeStruct((N, H, W, CO4), jnp.bfloat16),
                   jax.ShapeDtypeStruct((N, 2, CO4), jnp.float32)),
        in_specs=[
            pl.BlockSpec((None, H + 2, W + 2, Cin), lambda n, t: (n, 0, 0, 0)),
            pl.BlockSpec((K, CO4), lambda n, t: (0, 0)),
        ],
        out_specs=(
            pl.BlockSpec((None, TI, W, CO4), lambda n, t: (n, t, 0, 0)),
            pl.BlockSpec((None, 2, CO4), lambda n, t: (n, 0, 0)),
        ),
        compiler_params=pltpu.CompilerParams(
            dimension_semantics=("parallel", "arbitrary"),
            vmem_limit_bytes=48 * 1024 * 1024),
    )(xpad, w2)

    # --- Tiny glue: streamed stats -> BN scale/shift (train mode, biased var).
    tot = stats.sum(axis=0).reshape(2, 4, Cpad).sum(axis=1)   # (2, Cpad)
    count = jnp.float32(N * (2 * H) * (2 * W))
    mean = tot[0, :Cout] / count
    var = jnp.maximum(tot[1, :Cout] / count - mean * mean, 0.0)
    scale = gamma * lax.rsqrt(var + eps)                      # (Cout,)
    shift = beta - mean * scale

    # --- Fused XLA epilogue: BN apply + ReLU + depth-to-space + NHWC->NCHW.
    y = y1.reshape(N, H, W, 2, 2, Cpad)[..., :Cout].astype(jnp.float32)
    y = jnp.maximum(y * scale + shift, 0.0)                   # (N,H,W,pr,ps,Cout)
    out = jnp.transpose(y, (0, 5, 1, 3, 2, 4)).reshape(N, Cout, 2 * H, 2 * W)
    return out


def init_params(key, ch_in, ch_out):
    k1, k2 = jax.random.split(key)
    s = (2.0 / (9 * ch_in)) ** 0.5
    return {
        "w": jax.random.normal(k1, (3, 3, ch_in, ch_out), jnp.float32) * s,
        "b": jax.random.normal(k2, (ch_out,), jnp.float32) * 0.01,
        "gamma": jnp.ones((ch_out,), jnp.float32),
        "beta": jnp.zeros((ch_out,), jnp.float32),
    }


def _reference_forward(x_nchw, params, eps=1e-5):
    """Pure-JAX f32 reference (nearest 2x upsample + SAME conv+bias + train BN + ReLU)."""
    w, b, gamma, beta = params["w"], params["b"], params["gamma"], params["beta"]
    x = jnp.transpose(x_nchw, (0, 2, 3, 1))
    u = jnp.repeat(jnp.repeat(x, 2, axis=1), 2, axis=2)
    y = lax.conv_general_dilated(
        u, w, window_strides=(1, 1), padding="SAME",
        dimension_numbers=("NHWC", "HWIO", "NHWC")) + b
    mean = jnp.mean(y, axis=(0, 1, 2), keepdims=True)
    var = jnp.mean((y - mean) ** 2, axis=(0, 1, 2), keepdims=True)
    y = (y - mean) * lax.rsqrt(var + eps) * gamma + beta
    y = jnp.maximum(y, 0.0)
    return jnp.transpose(y, (0, 3, 1, 2))


if __name__ == "__main__":
    key = jax.random.PRNGKey(0)
    k_x, k_p = jax.random.split(key)

    N, C_in, C_out, H, W = 2, 4, 8, 16, 16
    x = jax.random.normal(k_x, (N, C_in, H, W), jnp.float32)   # NCHW, like PyTorch
    params = init_params(k_p, C_in, C_out)

    fwd = jax.jit(up_conv_forward)
    out = jax.block_until_ready(fwd(x, params))
    ref = jax.block_until_ready(_reference_forward(x, params))

    assert out.shape == (N, C_out, 2 * H, 2 * W), out.shape
    max_err = float(jnp.max(jnp.abs(out - ref)))
    # Tolerance accounts for bf16 MXU inputs (f32 accumulation) vs the f32 reference.
    assert jnp.allclose(out, ref, atol=5e-2, rtol=5e-2), max_err
    print("KERNEL_OK")
</pallas_src>

<mosaic_0001>
module attributes {stable_mosaic.version = 11 : i64} {
  func.func @_upconv_kernel(%arg0: i32, %arg1: i32, %arg2: memref<1x18x18x4xbf16, #tpu.memory_space<vmem>>, %arg3: memref<36x128xbf16, #tpu.memory_space<vmem>>, %arg4: memref<1x16x16x128xbf16, #tpu.memory_space<vmem>>, %arg5: memref<1x2x128xf32, #tpu.memory_space<vmem>>) attributes {dimension_semantics = [#tpu.dimension_semantics<parallel>, #tpu.dimension_semantics<arbitrary>], iteration_bounds = array<i64: 2, 1>, scalar_prefetch = 0 : i64, scratch_operands = 0 : i64, tpu.core_type = #tpu.core_type<tc>, window_params = [{transform_indices = @transform_0, window_bounds = array<i64: 1, 18, 18, 4>}, {pipeline_mode = #tpu.pipeline_mode<synchronous>, transform_indices = @transform_1, window_bounds = array<i64: 36, 128>}, {transform_indices = @transform_2, window_bounds = array<i64: 1, 16, 16, 128>}, {transform_indices = @transform_3, window_bounds = array<i64: 1, 2, 128>}]} {
    %c0_i32 = arith.constant 0 : i32
    %0 = arith.cmpi eq, %arg1, %c0_i32 : i32
    %1 = arith.extui %0 : i1 to i32
    %c0_i32_0 = arith.constant 0 : i32
    %2 = arith.cmpi ne, %1, %c0_i32_0 : i32
    scf.if %2 {
      %cst_17 = arith.constant 0.000000e+00 : f32
      %46 = vector.broadcast %cst_17 : f32 to vector<2x128xf32>
      %c0_18 = arith.constant 0 : index
      %c0_19 = arith.constant 0 : index
      %c0_20 = arith.constant 0 : index
      %47 = vector.load %arg5[%c0_18, %c0_19, %c0_20] : memref<1x2x128xf32, #tpu.memory_space<vmem>>, vector<1x2x128xf32>
      %48 = vector.shape_cast %47 : vector<1x2x128xf32> to vector<2x128xf32>
      %49 = vector.shape_cast %46 : vector<2x128xf32> to vector<1x2x128xf32>
      tpu.vector_store %arg5[%c0_18, %c0_19, %c0_20], %49 {strides = array<i32>} : memref<1x2x128xf32, #tpu.memory_space<vmem>>, vector<1x2x128xf32>,
    } else {
    }
    %c16_i32 = arith.constant 16 : i32
    %3 = arith.muli %arg1, %c16_i32 : i32
    %4 = tpu.assume_multiple %3, 8 : i32
    %c0 = arith.constant 0 : index
    %5 = arith.index_cast %4 : i32 to index
    %c0_1 = arith.constant 0 : index
    %c0_2 = arith.constant 0 : index
    %6 = vector.load %arg2[%c0, %5, %c0_1, %c0_2] : memref<1x18x18x4xbf16, #tpu.memory_space<vmem>>, vector<1x18x18x4xbf16>
    %7 = vector.shape_cast %6 : vector<1x18x18x4xbf16> to vector<18x18x4xbf16>
    %8 = vector.extract_strided_slice %7 {offsets = [0, 0, 0], sizes = [16, 16, 4], strides = [1, 1, 1]} : vector<18x18x4xbf16> to vector<16x16x4xbf16>
    %9 = vector.shape_cast %8 : vector<16x16x4xbf16> to vector<256x4xbf16>
    %10 = vector.extract_strided_slice %7 {offsets = [0, 1, 0], sizes = [16, 16, 4], strides = [1, 1, 1]} : vector<18x18x4xbf16> to vector<16x16x4xbf16>
    %11 = vector.shape_cast %10 : vector<16x16x4xbf16> to vector<256x4xbf16>
    %12 = vector.extract_strided_slice %7 {offsets = [0, 2, 0], sizes = [16, 16, 4], strides = [1, 1, 1]} : vector<18x18x4xbf16> to vector<16x16x4xbf16>
    %13 = vector.shape_cast %12 : vector<16x16x4xbf16> to vector<256x4xbf16>
    %14 = vector.extract_strided_slice %7 {offsets = [1, 0, 0], sizes = [16, 16, 4], strides = [1, 1, 1]} : vector<18x18x4xbf16> to vector<16x16x4xbf16>
    %15 = vector.shape_cast %14 : vector<16x16x4xbf16> to vector<256x4xbf16>
    %16 = vector.extract_strided_slice %7 {offsets = [1, 1, 0], sizes = [16, 16, 4], strides = [1, 1, 1]} : vector<18x18x4xbf16> to vector<16x16x4xbf16>
    %17 = vector.shape_cast %16 : vector<16x16x4xbf16> to vector<256x4xbf16>
    %18 = vector.extract_strided_slice %7 {offsets = [1, 2, 0], sizes = [16, 16, 4], strides = [1, 1, 1]} : vector<18x18x4xbf16> to vector<16x16x4xbf16>
    %19 = vector.shape_cast %18 : vector<16x16x4xbf16> to vector<256x4xbf16>
    %20 = vector.extract_strided_slice %7 {offsets = [2, 0, 0], sizes = [16, 16, 4], strides = [1, 1, 1]} : vector<18x18x4xbf16> to vector<16x16x4xbf16>
    %21 = vector.shape_cast %20 : vector<16x16x4xbf16> to vector<256x4xbf16>
    %22 = vector.extract_strided_slice %7 {offsets = [2, 1, 0], sizes = [16, 16, 4], strides = [1, 1, 1]} : vector<18x18x4xbf16> to vector<16x16x4xbf16>
    %23 = vector.shape_cast %22 : vector<16x16x4xbf16> to vector<256x4xbf16>
    %24 = vector.extract_strided_slice %7 {offsets = [2, 2, 0], sizes = [16, 16, 4], strides = [1, 1, 1]} : vector<18x18x4xbf16> to vector<16x16x4xbf16>
    %25 = vector.shape_cast %24 : vector<16x16x4xbf16> to vector<256x4xbf16>
    %26 = tpu.concatenate %9, %11, %13, %15, %17, %19, %21, %23, %25 in 1 : vector<256x4xbf16>, vector<256x4xbf16>, vector<256x4xbf16>, vector<256x4xbf16>, vector<256x4xbf16>, vector<256x4xbf16>, vector<256x4xbf16>, vector<256x4xbf16>, vector<256x4xbf16> -> vector<256x36xbf16>
    %c0_3 = arith.constant 0 : index
    %c0_4 = arith.constant 0 : index
    %27 = vector.load %arg3[%c0_3, %c0_4] : memref<36x128xbf16, #tpu.memory_space<vmem>>, vector<36x128xbf16>
    %cst = arith.constant dense<0.000000e+00> : vector<256x128xf32>
    %28 = tpu.matmul %26, %27, %cst {dimension_numbers = #tpu.dot_dimension_numbers<[1], [0], [0], [1], [0, 0, 1, 1], [], []>} : vector<256x36xbf16>, vector<36x128xbf16>, vector<256x128xf32> -> vector<256x128xf32>
    %29 = vector.shape_cast %28 : vector<256x128xf32> to vector<16x16x128xf32>
    %30 = arith.truncf %29 : vector<16x16x128xf32> to vector<16x16x128xbf16>
    %c0_5 = arith.constant 0 : index
    %c0_6 = arith.constant 0 : index
    %c0_7 = arith.constant 0 : index
    %c0_8 = arith.constant 0 : index
    %31 = vector.load %arg4[%c0_5, %c0_6, %c0_7, %c0_8] : memref<1x16x16x128xbf16, #tpu.memory_space<vmem>>, vector<1x16x16x128xbf16>
    %32 = vector.shape_cast %31 : vector<1x16x16x128xbf16> to vector<16x16x128xbf16>
    %33 = vector.shape_cast %30 : vector<16x16x128xbf16> to vector<1x16x16x128xbf16>
    tpu.vector_store %arg4[%c0_5, %c0_6, %c0_7, %c0_8], %33 {strides = array<i32>} : memref<1x16x16x128xbf16, #tpu.memory_space<vmem>>, vector<1x16x16x128xbf16>,
    %cst_9 = arith.constant dense<0.000000e+00> : vector<128xf32>
    %34 = vector.multi_reduction <add>, %28, %cst_9 [0] : vector<256x128xf32> to vector<128xf32>
    %35 = vector.shape_cast %34 : vector<128xf32> to vector<1x128xf32>
    %36 = arith.mulf %28, %28 : vector<256x128xf32>
    %cst_10 = arith.constant dense<0.000000e+00> : vector<128xf32>
    %37 = vector.multi_reduction <add>, %36, %cst_10 [0] : vector<256x128xf32> to vector<128xf32>
    %38 = vector.shape_cast %37 : vector<128xf32> to vector<1x128xf32>
    %c0_11 = arith.constant 0 : index
    %c0_12 = arith.constant 0 : index
    %c0_13 = arith.constant 0 : index
    %39 = vector.load %arg5[%c0_11, %c0_12, %c0_13] : memref<1x2x128xf32, #tpu.memory_space<vmem>>, vector<1x2x128xf32>
    %40 = vector.shape_cast %39 : vector<1x2x128xf32> to vector<2x128xf32>
    %41 = tpu.concatenate %35, %38 in 0 : vector<1x128xf32>, vector<1x128xf32> -> vector<2x128xf32>
    %42 = arith.addf %40, %41 : vector<2x128xf32>
    %c0_14 = arith.constant 0 : index
    %c0_15 = arith.constant 0 : index
    %c0_16 = arith.constant 0 : index
    %43 = vector.load %arg5[%c0_14, %c0_15, %c0_16] : memref<1x2x128xf32, #tpu.memory_space<vmem>>, vector<1x2x128xf32>
    %44 = vector.shape_cast %43 : vector<1x2x128xf32> to vector<2x128xf32>
    %45 = vector.shape_cast %42 : vector<2x128xf32> to vector<1x2x128xf32>
    tpu.vector_store %arg5[%c0_14, %c0_15, %c0_16], %45 {strides = array<i32>} : memref<1x2x128xf32, #tpu.memory_space<vmem>>, vector<1x2x128xf32>,
    return
  }
  func.func @transform_0(%arg0: i32, %arg1: i32) -> (i32, i32, i32, i32) {
    %c0_i32 = arith.constant 0 : i32
    %c0_i32_0 = arith.constant 0 : i32
    %c0_i32_1 = arith.constant 0 : i32
    %c0_i32_2 = arith.constant 0 : i32
    return %arg0, %c0_i32, %c0_i32_0, %c0_i32_1 : i32, i32, i32, i32
  }
  func.func @transform_1(%arg0: i32, %arg1: i32) -> (i32, i32) {
    %c0_i32 = arith.constant 0 : i32
    %c0_i32_0 = arith.constant 0 : i32
    %c0_i32_1 = arith.constant 0 : i32
    return %c0_i32, %c0_i32_0 : i32, i32
  }
  func.func @transform_2(%arg0: i32, %arg1: i32) -> (i32, i32, i32, i32) {
    %c0_i32 = arith.constant 0 : i32
    %c0_i32_0 = arith.constant 0 : i32
    %c0_i32_1 = arith.constant 0 : i32
    return %arg0, %arg1, %c0_i32, %c0_i32_0 : i32, i32, i32, i32
  }
  func.func @transform_3(%arg0: i32, %arg1: i32) -> (i32, i32, i32) {
    %c0_i32 = arith.constant 0 : i32
    %c0_i32_0 = arith.constant 0 : i32
    %c0_i32_1 = arith.constant 0 : i32
    return %arg0, %c0_i32, %c0_i32_0 : i32, i32, i32
  }
}

</mosaic_0001>

<llo_original>
// kernel: up_conv_forward.1
$region0: #{up_conv_forward.1}
  #allocation0 [shape = 'u32[]', space=smem, size = 0x4, offset = 0x4, fixed_abs, tag = 'smem constant byte address 0x4 - core index']
  #allocation1 [shape = 'u32[144,128]{1,0:T(1,128)}', space=vmem, size = 0x12000, scoped, tag = 'internal scratch']
  %s0 = inlined_call_operand.vmem [shape: bf16[2,18,18,4], index: 0, kind: input, shape index: {}]
  %s1 = inlined_call_operand.vmem [shape: bf16[36,128], index: 1, kind: input, shape index: {}]
  %s2 = inlined_call_operand.vmem [shape: bf16[2,16,16,128], index: 2, kind: output, shape index: {0}]
  %s3 = inlined_call_operand.vmem [shape: f32[2,2,128], index: 3, kind: output, shape index: {1}]
  %4 = xla_tuple %s2, %s3
  %s5 = sld [smem:[#allocation0]]
  $region53: #{up_conv_forward.1} parent=0
    _
  %s7 = ssub.s32 1, %s5
  %s8 = scalar_select 0, %s7, %s5
  loop: start=0, step=1, limit=4
  $region2: #{up_conv_forward.1} parent=0 // loop_pre_header
    _
  $region3: #{up_conv_forward.1} parent=0 // loop_header
    %s10 = sphi 0, %s14
    %p11 = scmp.ge.s32.totalorder %s10, 4
    %s17 = sphi 0, %s29
    %s18 = sphi 0, %s25
    %s19 = sphi 0, %s17
    %s20 = sphi 0, %s18
    %s21 = sphi 0, %s19
    %s22 = sphi 0, %s20
    %s32 = sphi 0, %s34
    %s35 = sphi 0, %s32
    %s36 = sphi 0, %s35
    %s52 = sphi 0, %s36
    %s56 = sphi 0, %s56
    %s58 = sphi 0, %s56
    %s59 = sphi 0, %s58
    %s73 = sphi 0, %s59
    %s81 = sphi 0, %s83
    %s84 = sphi 0, %s81
    %s85 = sphi 0, %s84
    %s101 = sphi 0, %s85
    %s107 = sphi 0, %s109
    %s110 = sphi 0, %s107
    %s111 = sphi 0, %s110
    %s127 = sphi 0, %s111
  $region4: #{up_conv_forward.1} parent=0 // loop_header_branch
    %13 = sbr.rel (%p11) target = $region8
  $region5: #{up_conv_forward.1} parent=0 // loop_body
    %s15 = ssub.s32 %s10, 1
    %s16 = ssub.s32 %s10, 2
    %s23 = sadd.s32 1, %s18
    %p24 = scmp.ge.s32.totalorder %s23, 1
    %s25 = scalar_select %p24, 0, %s23
    %s26 = sadd.s32 1, %s17
    %s27 = scalar_select %p24, %s26, %s17
    %p28 = scmp.ge.s32.totalorder %s27, 2
    %s29 = scalar_select %p28, 0, %s27
    %s30 = ssub.s32 %s17, %s29
    %p31 = scmp.eq.s32.totalorder %s30, 0
    %s33 = sadd.s32 %s32, 1
    %s34 = scalar_select %p31, %s32, %s33
    %p37 = pneg %p31
    %p38 = scmp.eq.s32.totalorder %s10, 1
    %p39 = por %p37, %p38
    %p40 = scmp.ne.s32.totalorder %s32, %s35
    %p41 = scmp.eq.s32.totalorder %s10, 0
    %p42 = por %p40, %p41
    %p43 = scmp.ne.s32.totalorder %s32, %s35
    %p44 = scmp.eq.s32.totalorder %s15, 1
    %p45 = por %p43, %p44
    %p46 = scmp.ne.s32.totalorder %s35, %s36
    %p47 = scmp.eq.s32.totalorder %s15, 0
    %p48 = por %p46, %p47
    %p49 = scmp.ne.s32.totalorder %s35, %s36
    %p50 = scmp.eq.s32.totalorder %s16, 1
    %p51 = por %p49, %p50
    %p53 = scmp.ne.s32.totalorder %s36, %s52
    %p54 = scmp.eq.s32.totalorder %s16, 0
    %p55 = por %p53, %p54
    %s57 = sadd.s32 %s56, 1
    %p60 = scmp.eq.s32.totalorder %s10, 1
    %p61 = scmp.ne.s32.totalorder %s56, %s58
    %p62 = scmp.eq.s32.totalorder %s10, 0
    %p63 = por %p61, %p62
    %p64 = scmp.ne.s32.totalorder %s56, %s58
    %p65 = scmp.eq.s32.totalorder %s15, 1
    %p66 = por %p64, %p65
    %p67 = scmp.ne.s32.totalorder %s58, %s59
    %p68 = scmp.eq.s32.totalorder %s15, 0
    %p69 = por %p67, %p68
    %p70 = scmp.ne.s32.totalorder %s58, %s59
    %p71 = scmp.eq.s32.totalorder %s16, 1
    %p72 = por %p70, %p71
    %p74 = scmp.ne.s32.totalorder %s59, %s73
    %p75 = scmp.eq.s32.totalorder %s16, 0
    %p76 = por %p74, %p75
    %s77 = ssub.s32 %s17, %s29
    %s78 = ssub.s32 %s18, %s25
    %s79 = sor.u32 %s77, %s78
    %p80 = scmp.eq.s32.totalorder %s79, 0
    %s82 = sadd.s32 %s81, 1
    %s83 = scalar_select %p80, %s81, %s82
    %p86 = pneg %p80
    %p87 = scmp.eq.s32.totalorder %s10, 1
    %p88 = por %p86, %p87
    %p89 = scmp.ne.s32.totalorder %s81, %s84
    %p90 = scmp.eq.s32.totalorder %s10, 0
    %p91 = por %p89, %p90
    %p92 = scmp.ne.s32.totalorder %s81, %s84
    %p93 = scmp.eq.s32.totalorder %s15, 1
    %p94 = por %p92, %p93
    %p95 = scmp.ne.s32.totalorder %s84, %s85
    %p96 = scmp.eq.s32.totalorder %s15, 0
    %p97 = por %p95, %p96
    %p98 = scmp.ne.s32.totalorder %s84, %s85
    %p99 = scmp.eq.s32.totalorder %s16, 1
    %p100 = por %p98, %p99
    %p102 = scmp.ne.s32.totalorder %s85, %s101
    %p103 = scmp.eq.s32.totalorder %s16, 0
    %p104 = por %p102, %p103
    %s105 = ssub.s32 %s17, %s29
    %p106 = scmp.eq.s32.totalorder %s105, 0
    %s108 = sadd.s32 %s107, 1
    %s109 = scalar_select %p106, %s107, %s108
    %p112 = pneg %p106
    %p113 = scmp.eq.s32.totalorder %s10, 1
    %p114 = por %p112, %p113
    %p115 = scmp.ne.s32.totalorder %s107, %s110
    %p116 = scmp.eq.s32.totalorder %s10, 0
    %p117 = por %p115, %p116
    %p118 = scmp.ne.s32.totalorder %s107, %s110
    %p119 = scmp.eq.s32.totalorder %s15, 1
    %p120 = por %p118, %p119
    %p121 = scmp.ne.s32.totalorder %s110, %s111
    %p122 = scmp.eq.s32.totalorder %s15, 0
    %p123 = por %p121, %p122
    %p124 = scmp.ne.s32.totalorder %s110, %s111
    %p125 = scmp.eq.s32.totalorder %s16, 1
    %p126 = por %p124, %p125
    %p128 = scmp.ne.s32.totalorder %s111, %s127
    %p129 = scmp.eq.s32.totalorder %s16, 0
    %p130 = por %p128, %p129
    %p131 = scmp.le.s32.totalorder 1, %s10
    %p132 = scmp.lt.s32.totalorder %s10, 3
    %p133 = pnand %p131, %p132
    %p134 = pneg %p133
    // Predicated region
    $region9: #{up_conv_forward.1} parent=5 // pred_check
      _
    $region10: #{up_conv_forward.1} parent=5 // pred_check_branch
      %136 = sbr.rel (%p133) target = $region12
    $region11: #{up_conv_forward.1} parent=5 // pred_region
      %s137 = ssub.s32 %s10, 1
      // Predicated region
      $region13: #{up_conv_forward.1} parent=11 // pred_check
        %p138 = pneg %p69
      $region14: #{up_conv_forward.1} parent=11 // pred_check_branch
        %140 = sbr.rel (%p138) target = $region16
      $region15: #{up_conv_forward.1} parent=11 // pred_region
        _
      $region16: #{up_conv_forward.1} parent=11 // pred_fallthru
        _
    $region12: #{up_conv_forward.1} parent=5 // pred_fallthru
      _
    %p141 = scmp.lt.s32.totalorder %s10, 2
    // Predicated region
    $region17: #{up_conv_forward.1} parent=5 // pred_check
      %p142 = pneg %p141
    $region18: #{up_conv_forward.1} parent=5 // pred_check_branch
      %144 = sbr.rel (%p142) target = $region20
    $region19: #{up_conv_forward.1} parent=5 // pred_region
      // Predicated region
      $region21: #{up_conv_forward.1} parent=19 // pred_check
        %p145 = pneg %p42
      $region22: #{up_conv_forward.1} parent=19 // pred_check_branch
        %147 = sbr.rel (%p145) target = $region24
      $region23: #{up_conv_forward.1} parent=19 // pred_region
        %p148 = scmp.lt.s32.totalorder %s17, 1
        %s149 = scalar_select %p148, %s17, 1
        %s150 = smul.addr %s149, 54
        %s151 = smul.addr %s150, 4
        %s152 = scalar_lea.vmem %s0, %s151
      $region24: #{up_conv_forward.1} parent=19 // pred_fallthru
        _
    $region20: #{up_conv_forward.1} parent=5 // pred_fallthru
      _
    %p153 = scmp.le.s32.totalorder 1, %s10
    %p154 = scmp.lt.s32.totalorder %s10, 3
    %p155 = pnand %p153, %p154
    %p156 = pneg %p155
    // Predicated region
    $region25: #{up_conv_forward.1} parent=5 // pred_check
      _
    $region26: #{up_conv_forward.1} parent=5 // pred_check_branch
      %158 = sbr.rel (%p155) target = $region28
    $region27: #{up_conv_forward.1} parent=5 // pred_region
      %s159 = ssub.s32 %s10, 1
      %p160 = scmp.lt.s32.totalorder %s19, 1
      %s161 = scalar_select %p160, %s19, 1
      %s162 = smul.addr %s161, 54
      %s163 = smul.addr %s162, 4
      %s164 = scalar_lea.vmem %s0, %s163
      %p165 = pneg %p48
      %p166 = pneg %p45
      %p167 = pneg %p69
      %p168 = pneg %p66
      %p169 = pneg %p97
      %p170 = pneg %p94
      %s171 = smul.u32 16, %s20
      %p172 = scmp.lt.s32.totalorder %s19, 1
      %s173 = scalar_select %p172, %s19, 1
      %p174 = scmp.lt.s32.totalorder %s171, 15
      %s175 = scalar_select %p174, %s171, 15
      %s176 = smul.addr %s175, 2
      %s177 = smul.addr %s173, 32
      %s178 = sadd.s32 %s176, %s177
      %s179 = smul.addr %s178, 4
      %s180 = scalar_lea.vmem %s2, %s179
      %p181 = pneg %p123
      %p182 = pneg %p120
      %p183 = scmp.lt.s32.totalorder %s19, 1
      %s184 = scalar_select %p183, %s19, 1
      %s185 = smul.addr %s184, 2
      %s186 = scalar_lea.vmem %s3, %s185
      %p187 = scmp.lt.s32.totalorder %s19, 1
      %s188 = scalar_select %p187, %s19, 1
      %s189 = smul.addr %s188, 54
      %s190 = smul.addr %s189, 4
      %s191 = scalar_lea.vmem %s0, %s190
      %s192 = smul.u32 16, %s20
      %p193 = scmp.lt.s32.totalorder %s19, 1
      %s194 = scalar_select %p193, %s19, 1
      %p195 = scmp.lt.s32.totalorder %s192, 15
      %s196 = scalar_select %p195, %s192, 15
      %s197 = smul.addr %s196, 2
      %s198 = smul.addr %s194, 32
      %s199 = sadd.s32 %s197, %s198
      %s200 = smul.addr %s199, 4
      %s201 = scalar_lea.vmem %s2, %s200
      %s202 = smul.u32 16, %s20
      %p203 = scmp.lt.s32.totalorder %s19, 1
      %s204 = scalar_select %p203, %s19, 1
      %s205 = smul.addr %s204, 2
      %s206 = scalar_lea.vmem %s3, %s205
      %p208 = scmp.eq.s32.totalorder %s20, 0
      // Predicated region
      $region29: #{up_conv_forward.1} parent=27 // pred_check
        %p209 = pneg %p208
      $region30: #{up_conv_forward.1} parent=27 // pred_check_branch
        %211 = sbr.rel (%p209) target = $region32
      $region31: #{up_conv_forward.1} parent=27 // pred_region
        %212 = vst [vmem:[%s206] sm:$0x3] 0.0
      $region32: #{up_conv_forward.1} parent=27 // pred_fallthru
        _
      %s213 = smul.u32 %s20, 16
      %s214 = smul.u32 %s213, 3
      %s215 = smul.addr %s214, 4
      %s216 = scalar_lea.vmem %s191, %s215
      %v217 = vld [vmem:[%s216] sm:$0xf]
      %v218 = vld [vmem:[%s216 + $0x4] sm:$0xf]
      %v219 = vld [vmem:[%s216 + $0x8] sm:$0x1]
      %v220 = vld [vmem:[%s216 + $0xc] sm:$0xf]
      %v221 = vld [vmem:[%s216 + $0x10] sm:$0xf]
      %v222 = vld [vmem:[%s216 + $0x14] sm:$0x1]
      %v223 = vld [vmem:[%s216 + $0x18] sm:$0xf]
      %v224 = vld [vmem:[%s216 + $0x1c] sm:$0xf]
      %v225 = vld [vmem:[%s216 + $0x20] sm:$0x1]
      %v226 = vld [vmem:[%s216 + $0x24] sm:$0xf]
      %v227 = vld [vmem:[%s216 + $0x28] sm:$0xf]
      %v228 = vld [vmem:[%s216 + $0x2c] sm:$0x1]
      %v229 = vld [vmem:[%s216 + $0x30] sm:$0xf]
      %v230 = vld [vmem:[%s216 + $0x34] sm:$0xf]
      %v231 = vld [vmem:[%s216 + $0x38] sm:$0x1]
      %v232 = vld [vmem:[%s216 + $0x3c] sm:$0xf]
      %v233 = vld [vmem:[%s216 + $0x40] sm:$0xf]
      %v234 = vld [vmem:[%s216 + $0x44] sm:$0x1]
      %v235 = vld [vmem:[%s216 + $0x48] sm:$0xf]
      %v236 = vld [vmem:[%s216 + $0x4c] sm:$0xf]
      %v237 = vld [vmem:[%s216 + $0x50] sm:$0x1]
      %v238 = vld [vmem:[%s216 + $0x54] sm:$0xf]
      %v239 = vld [vmem:[%s216 + $0x58] sm:$0xf]
      %v240 = vld [vmem:[%s216 + $0x5c] sm:$0x1]
      %v241 = vld [vmem:[%s216 + $0x60] sm:$0xf]
      %v242 = vld [vmem:[%s216 + $0x64] sm:$0xf]
      %v243 = vld [vmem:[%s216 + $0x68] sm:$0x1]
      %v244 = vld [vmem:[%s216 + $0x6c] sm:$0xf]
      %v245 = vld [vmem:[%s216 + $0x70] sm:$0xf]
      %v246 = vld [vmem:[%s216 + $0x74] sm:$0x1]
      %v247 = vld [vmem:[%s216 + $0x78] sm:$0xf]
      %v248 = vld [vmem:[%s216 + $0x7c] sm:$0xf]
      %v249 = vld [vmem:[%s216 + $0x80] sm:$0x1]
      %v250 = vld [vmem:[%s216 + $0x84] sm:$0xf]
      %v251 = vld [vmem:[%s216 + $0x88] sm:$0xf]
      %v252 = vld [vmem:[%s216 + $0x8c] sm:$0x1]
      %v253 = vld [vmem:[%s216 + $0x90] sm:$0xf]
      %v254 = vld [vmem:[%s216 + $0x94] sm:$0xf]
      %v255 = vld [vmem:[%s216 + $0x98] sm:$0x1]
      %v256 = vld [vmem:[%s216 + $0x9c] sm:$0xf]
      %v257 = vld [vmem:[%s216 + $0xa0] sm:$0xf]
      %v258 = vld [vmem:[%s216 + $0xa4] sm:$0x1]
      %v259 = vld [vmem:[%s216 + $0xa8] sm:$0xf]
      %v260 = vld [vmem:[%s216 + $0xac] sm:$0xf]
      %v261 = vld [vmem:[%s216 + $0xb0] sm:$0x1]
      %v262 = vld [vmem:[%s216 + $0xb4] sm:$0xf]
      %v263 = vld [vmem:[%s216 + $0xb8] sm:$0xf]
      %v264 = vld [vmem:[%s216 + $0xbc] sm:$0x1]
      %v265 = vld [vmem:[%s216 + $0xc0] sm:$0xf]
      %v266 = vld [vmem:[%s216 + $0xc4] sm:$0xf]
      %v267 = vld [vmem:[%s216 + $0xc8] sm:$0x1]
      %v268 = vld [vmem:[%s216 + $0xcc] sm:$0xf]
      %v269 = vld [vmem:[%s216 + $0xd0] sm:$0xf]
      %v270 = vld [vmem:[%s216 + $0xd4] sm:$0x1]
      %vm271 = vsmask.f32 3328
      %vm272 = vsmask.f32 7440
      %vm273 = vmor %vm271, %vm272
      %v275 = vshrl.u32 %v217, 16
      %v277 = vrot.slane %v275, 4
      %v278 = vshll.u32 %v217, 16
      %v280 = vrot.slane %v278, 5
      %v281 = vor.u32 %v277, %v280
      %v282 = vrot.slane %v281, 4
      %v284 = vshll.u32 %v218, 16
      %v286 = vrot.slane %v284, 5
      %v287 = vsel %vm273, %v282, %v286
      %v288 = vshrl.u32 %v218, 16
      %v290 = vrot.slane %v288, 4
      %v291 = vor.u32 %v290, %v286
      %v292 = vrot.slane %v291, 4
      %v294 = vshll.u32 %v219, 16
      %v296 = vrot.slane %v294, 5
      %v297 = vsel %vm273, %v292, %v296
      %v299 = vshrl.u32 %v220, 16
      %v301 = vrot.slane %v299, 4
      %v302 = vshll.u32 %v220, 16
      %v304 = vrot.slane %v302, 5
      %v305 = vor.u32 %v301, %v304
      %v306 = vrot.slane %v305, 4
      %v308 = vshll.u32 %v221, 16
      %v310 = vrot.slane %v308, 5
      %v311 = vsel %vm273, %v306, %v310
      %v312 = vshrl.u32 %v221, 16
      %v314 = vrot.slane %v312, 4
      %v315 = vor.u32 %v314, %v310
      %v316 = vrot.slane %v315, 4
      %v318 = vshll.u32 %v222, 16
      %v320 = vrot.slane %v318, 5
      %v321 = vsel %vm273, %v316, %v320
      %v323 = vshrl.u32 %v223, 16
      %v325 = vrot.slane %v323, 4
      %v326 = vshll.u32 %v223, 16
      %v328 = vrot.slane %v326, 5
      %v329 = vor.u32 %v325, %v328
      %v330 = vrot.slane %v329, 4
      %v332 = vshll.u32 %v224, 16
      %v334 = vrot.slane %v332, 5
      %v335 = vsel %vm273, %v330, %v334
      %v336 = vshrl.u32 %v224, 16
      %v338 = vrot.slane %v336, 4
      %v339 = vor.u32 %v338, %v334
      %v340 = vrot.slane %v339, 4
      %v342 = vshll.u32 %v225, 16
      %v344 = vrot.slane %v342, 5
      %v345 = vsel %vm273, %v340, %v344
      %v347 = vshrl.u32 %v226, 16
      %v349 = vrot.slane %v347, 4
      %v350 = vshll.u32 %v226, 16
      %v352 = vrot.slane %v350, 5
      %v353 = vor.u32 %v349, %v352
      %v354 = vrot.slane %v353, 4
      %v356 = vshll.u32 %v227, 16
      %v358 = vrot.slane %v356, 5
      %v359 = vsel %vm273, %v354, %v358
      %v360 = vshrl.u32 %v227, 16
      %v362 = vrot.slane %v360, 4
      %v363 = vor.u32 %v362, %v358
      %v364 = vrot.slane %v363, 4
      %v366 = vshll.u32 %v228, 16
      %v368 = vrot.slane %v366, 5
      %v369 = vsel %vm273, %v364, %v368
      %v371 = vshrl.u32 %v229, 16
      %v373 = vrot.slane %v371, 4
      %v374 = vshll.u32 %v229, 16
      %v376 = vrot.slane %v374, 5
      %v377 = vor.u32 %v373, %v376
      %v378 = vrot.slane %v377, 4
      %v380 = vshll.u32 %v230, 16
      %v382 = vrot.slane %v380, 5
      %v383 = vsel %vm273, %v378, %v382
      %v384 = vshrl.u32 %v230, 16
      %v386 = vrot.slane %v384, 4
      %v387 = vor.u32 %v386, %v382
      %v388 = vrot.slane %v387, 4
      %v390 = vshll.u32 %v231, 16
      %v392 = vrot.slane %v390, 5
      %v393 = vsel %vm273, %v388, %v392
      %v395 = vshrl.u32 %v232, 16
      %v397 = vrot.slane %v395, 4
      %v398 = vshll.u32 %v232, 16
      %v400 = vrot.slane %v398, 5
      %v401 = vor.u32 %v397, %v400
      %v402 = vrot.slane %v401, 4
      %v404 = vshll.u32 %v233, 16
      %v406 = vrot.slane %v404, 5
      %v407 = vsel %vm273, %v402, %v406
      %v408 = vshrl.u32 %v233, 16
      %v410 = vrot.slane %v408, 4
      %v411 = vor.u32 %v410, %v406
      %v412 = vrot.slane %v411, 4
      %v414 = vshll.u32 %v234, 16
      %v416 = vrot.slane %v414, 5
      %v417 = vsel %vm273, %v412, %v416
      %v419 = vshrl.u32 %v235, 16
      %v421 = vrot.slane %v419, 4
      %v422 = vshll.u32 %v235, 16
      %v424 = vrot.slane %v422, 5
      %v425 = vor.u32 %v421, %v424
      %v426 = vrot.slane %v425, 4
      %v428 = vshll.u32 %v236, 16
      %v430 = vrot.slane %v428, 5
      %v431 = vsel %vm273, %v426, %v430
      %v432 = vshrl.u32 %v236, 16
      %v434 = vrot.slane %v432, 4
      %v435 = vor.u32 %v434, %v430
      %v436 = vrot.slane %v435, 4
      %v438 = vshll.u32 %v237, 16
      %v440 = vrot.slane %v438, 5
      %v441 = vsel %vm273, %v436, %v440
      %v443 = vshrl.u32 %v238, 16
      %v445 = vrot.slane %v443, 4
      %v446 = vshll.u32 %v238, 16
      %v448 = vrot.slane %v446, 5
      %v449 = vor.u32 %v445, %v448
      %v450 = vrot.slane %v449, 4
      %v452 = vshll.u32 %v239, 16
      %v454 = vrot.slane %v452, 5
      %v455 = vsel %vm273, %v450, %v454
      %v456 = vshrl.u32 %v239, 16
      %v458 = vrot.slane %v456, 4
      %v459 = vor.u32 %v458, %v454
      %v460 = vrot.slane %v459, 4
      %v462 = vshll.u32 %v240, 16
      %v464 = vrot.slane %v462, 5
      %v465 = vsel %vm273, %v460, %v464
      %v467 = vshrl.u32 %v241, 16
      %v469 = vrot.slane %v467, 4
      %v470 = vshll.u32 %v241, 16
      %v472 = vrot.slane %v470, 5
      %v473 = vor.u32 %v469, %v472
      %v474 = vrot.slane %v473, 4
      %v476 = vshll.u32 %v242, 16
      %v478 = vrot.slane %v476, 5
      %v479 = vsel %vm273, %v474, %v478
      %v480 = vshrl.u32 %v242, 16
      %v482 = vrot.slane %v480, 4
      %v483 = vor.u32 %v482, %v478
      %v484 = vrot.slane %v483, 4
      %v486 = vshll.u32 %v243, 16
      %v488 = vrot.slane %v486, 5
      %v489 = vsel %vm273, %v484, %v488
      %v491 = vshrl.u32 %v244, 16
      %v493 = vrot.slane %v491, 4
      %v494 = vshll.u32 %v244, 16
      %v496 = vrot.slane %v494, 5
      %v497 = vor.u32 %v493, %v496
      %v498 = vrot.slane %v497, 4
      %v500 = vshll.u32 %v245, 16
      %v502 = vrot.slane %v500, 5
      %v503 = vsel %vm273, %v498, %v502
      %v504 = vshrl.u32 %v245, 16
      %v506 = vrot.slane %v504, 4
      %v507 = vor.u32 %v506, %v502
      %v508 = vrot.slane %v507, 4
      %v510 = vshll.u32 %v246, 16
      %v512 = vrot.slane %v510, 5
      %v513 = vsel %vm273, %v508, %v512
      %v515 = vshrl.u32 %v247, 16
      %v517 = vrot.slane %v515, 4
      %v518 = vshll.u32 %v247, 16
      %v520 = vrot.slane %v518, 5
      %v521 = vor.u32 %v517, %v520
      %v522 = vrot.slane %v521, 4
      %v524 = vshll.u32 %v248, 16
      %v526 = vrot.slane %v524, 5
      %v527 = vsel %vm273, %v522, %v526
      %v528 = vshrl.u32 %v248, 16
      %v530 = vrot.slane %v528, 4
      %v531 = vor.u32 %v530, %v526
      %v532 = vrot.slane %v531, 4
      %v534 = vshll.u32 %v249, 16
      %v536 = vrot.slane %v534, 5
      %v537 = vsel %vm273, %v532, %v536
      %v539 = vshrl.u32 %v250, 16
      %v541 = vrot.slane %v539, 4
      %v542 = vshll.u32 %v250, 16
      %v544 = vrot.slane %v542, 5
      %v545 = vor.u32 %v541, %v544
      %v546 = vrot.slane %v545, 4
      %v548 = vshll.u32 %v251, 16
      %v550 = vrot.slane %v548, 5
      %v551 = vsel %vm273, %v546, %v550
      %v552 = vshrl.u32 %v251, 16
      %v554 = vrot.slane %v552, 4
      %v555 = vor.u32 %v554, %v550
      %v556 = vrot.slane %v555, 4
      %v558 = vshll.u32 %v252, 16
      %v560 = vrot.slane %v558, 5
      %v561 = vsel %vm273, %v556, %v560
      %v563 = vshrl.u32 %v253, 16
      %v565 = vrot.slane %v563, 4
      %v566 = vshll.u32 %v253, 16
      %v568 = vrot.slane %v566, 5
      %v569 = vor.u32 %v565, %v568
      %v570 = vrot.slane %v569, 4
      %v572 = vshll.u32 %v254, 16
      %v574 = vrot.slane %v572, 5
      %v575 = vsel %vm273, %v570, %v574
      %v576 = vshrl.u32 %v254, 16
      %v578 = vrot.slane %v576, 4
      %v579 = vor.u32 %v578, %v574
      %v580 = vrot.slane %v579, 4
      %v582 = vshll.u32 %v255, 16
      %v584 = vrot.slane %v582, 5
      %v585 = vsel %vm273, %v580, %v584
      %v587 = vshrl.u32 %v256, 16
      %v589 = vrot.slane %v587, 4
      %v590 = vshll.u32 %v256, 16
      %v592 = vrot.slane %v590, 5
      %v593 = vor.u32 %v589, %v592
      %v594 = vrot.slane %v593, 4
      %v596 = vshll.u32 %v257, 16
      %v598 = vrot.slane %v596, 5
      %v599 = vsel %vm273, %v594, %v598
      %v600 = vshrl.u32 %v257, 16
      %v602 = vrot.slane %v600, 4
      %v603 = vor.u32 %v602, %v598
      %v604 = vrot.slane %v603, 4
      %v606 = vshll.u32 %v258, 16
      %v608 = vrot.slane %v606, 5
      %v609 = vsel %vm273, %v604, %v608
      %v611 = vshrl.u32 %v259, 16
      %v613 = vrot.slane %v611, 4
      %v614 = vshll.u32 %v259, 16
      %v616 = vrot.slane %v614, 5
      %v617 = vor.u32 %v613, %v616
      %v618 = vrot.slane %v617, 4
      %v620 = vshll.u32 %v260, 16
      %v622 = vrot.slane %v620, 5
      %v623 = vsel %vm273, %v618, %v622
      %v624 = vshrl.u32 %v260, 16
      %v626 = vrot.slane %v624, 4
      %v627 = vor.u32 %v626, %v622
      %v628 = vrot.slane %v627, 4
      %v630 = vshll.u32 %v261, 16
      %v632 = vrot.slane %v630, 5
      %v633 = vsel %vm273, %v628, %v632
      %v635 = vshrl.u32 %v262, 16
      %v637 = vrot.slane %v635, 4
      %v638 = vshll.u32 %v262, 16
      %v640 = vrot.slane %v638, 5
      %v641 = vor.u32 %v637, %v640
      %v642 = vrot.slane %v641, 4
      %v644 = vshll.u32 %v263, 16
      %v646 = vrot.slane %v644, 5
      %v647 = vsel %vm273, %v642, %v646
      %v648 = vshrl.u32 %v263, 16
      %v650 = vrot.slane %v648, 4
      %v651 = vor.u32 %v650, %v646
      %v652 = vrot.slane %v651, 4
      %v654 = vshll.u32 %v264, 16
      %v656 = vrot.slane %v654, 5
      %v657 = vsel %vm273, %v652, %v656
      %vm706 = vcmask 1042432
      %vm707 = vcmask 1046532
      %vm708 = vmor %vm706, %vm707
      %v709 = vrot.slane %v217, 5
      %v710 = vrot.slane %v709, 4
      %v711 = vrot.slane %v218, 5
      %v712 = vsel %vm708, %v710, %v711
      %v713 = vrot.slane %v711, 4
      %v714 = vrot.slane %v219, 5
      %v715 = vsel %vm708, %v713, %v714
      %v716 = vrot.slane %v220, 5
      %v717 = vrot.slane %v716, 4
      %v718 = vrot.slane %v221, 5
      %v719 = vsel %vm708, %v717, %v718
      %v720 = vrot.slane %v718, 4
      %v721 = vrot.slane %v222, 5
      %v722 = vsel %vm708, %v720, %v721
      %v723 = vrot.slane %v223, 5
      %v724 = vrot.slane %v723, 4
      %v725 = vrot.slane %v224, 5
      %v726 = vsel %vm708, %v724, %v725
      %v727 = vrot.slane %v725, 4
      %v728 = vrot.slane %v225, 5
      %v729 = vsel %vm708, %v727, %v728
      %v730 = vrot.slane %v226, 5
      %v731 = vrot.slane %v730, 4
      %v732 = vrot.slane %v227, 5
      %v733 = vsel %vm708, %v731, %v732
      %v734 = vrot.slane %v732, 4
      %v735 = vrot.slane %v228, 5
      %v736 = vsel %vm708, %v734, %v735
      %v737 = vrot.slane %v229, 5
      %v738 = vrot.slane %v737, 4
      %v739 = vrot.slane %v230, 5
      %v740 = vsel %vm708, %v738, %v739
      %v741 = vrot.slane %v739, 4
      %v742 = vrot.slane %v231, 5
      %v743 = vsel %vm708, %v741, %v742
      %v744 = vrot.slane %v232, 5
      %v745 = vrot.slane %v744, 4
      %v746 = vrot.slane %v233, 5
      %v747 = vsel %vm708, %v745, %v746
      %v748 = vrot.slane %v746, 4
      %v749 = vrot.slane %v234, 5
      %v750 = vsel %vm708, %v748, %v749
      %v751 = vrot.slane %v235, 5
      %v752 = vrot.slane %v751, 4
      %v753 = vrot.slane %v236, 5
      %v754 = vsel %vm708, %v752, %v753
      %v755 = vrot.slane %v753, 4
      %v756 = vrot.slane %v237, 5
      %v757 = vsel %vm708, %v755, %v756
      %v758 = vrot.slane %v238, 5
      %v759 = vrot.slane %v758, 4
      %v760 = vrot.slane %v239, 5
      %v761 = vsel %vm708, %v759, %v760
      %v762 = vrot.slane %v760, 4
      %v763 = vrot.slane %v240, 5
      %v764 = vsel %vm708, %v762, %v763
      %v765 = vrot.slane %v241, 5
      %v766 = vrot.slane %v765, 4
      %v767 = vrot.slane %v242, 5
      %v768 = vsel %vm708, %v766, %v767
      %v769 = vrot.slane %v767, 4
      %v770 = vrot.slane %v243, 5
      %v771 = vsel %vm708, %v769, %v770
      %v772 = vrot.slane %v244, 5
      %v773 = vrot.slane %v772, 4
      %v774 = vrot.slane %v245, 5
      %v775 = vsel %vm708, %v773, %v774
      %v776 = vrot.slane %v774, 4
      %v777 = vrot.slane %v246, 5
      %v778 = vsel %vm708, %v776, %v777
      %v779 = vrot.slane %v247, 5
      %v780 = vrot.slane %v779, 4
      %v781 = vrot.slane %v248, 5
      %v782 = vsel %vm708, %v780, %v781
      %v783 = vrot.slane %v781, 4
      %v784 = vrot.slane %v249, 5
      %v785 = vsel %vm708, %v783, %v784
      %v786 = vrot.slane %v250, 5
      %v787 = vrot.slane %v786, 4
      %v788 = vrot.slane %v251, 5
      %v789 = vsel %vm708, %v787, %v788
      %v790 = vrot.slane %v788, 4
      %v791 = vrot.slane %v252, 5
      %v792 = vsel %vm708, %v790, %v791
      %v793 = vrot.slane %v253, 5
      %v794 = vrot.slane %v793, 4
      %v795 = vrot.slane %v254, 5
      %v796 = vsel %vm708, %v794, %v795
      %v797 = vrot.slane %v795, 4
      %v798 = vrot.slane %v255, 5
      %v799 = vsel %vm708, %v797, %v798
      %v800 = vrot.slane %v256, 5
      %v801 = vrot.slane %v800, 4
      %v802 = vrot.slane %v257, 5
      %v803 = vsel %vm708, %v801, %v802
      %v804 = vrot.slane %v802, 4
      %v805 = vrot.slane %v258, 5
      %v806 = vsel %vm708, %v804, %v805
      %v807 = vrot.slane %v259, 5
      %v808 = vrot.slane %v807, 4
      %v809 = vrot.slane %v260, 5
      %v810 = vsel %vm708, %v808, %v809
      %v811 = vrot.slane %v809, 4
      %v812 = vrot.slane %v261, 5
      %v813 = vsel %vm708, %v811, %v812
      %v814 = vrot.slane %v262, 5
      %v815 = vrot.slane %v814, 4
      %v816 = vrot.slane %v263, 5
      %v817 = vsel %vm708, %v815, %v816
      %v818 = vrot.slane %v816, 4
      %v819 = vrot.slane %v264, 5
      %v820 = vsel %vm708, %v818, %v819
      %v822 = vshrl.u32 %v265, 16
      %v824 = vrot.slane %v822, 4
      %v825 = vshll.u32 %v265, 16
      %v827 = vrot.slane %v825, 5
      %v828 = vor.u32 %v824, %v827
      %v829 = vrot.slane %v828, 4
      %v831 = vshll.u32 %v266, 16
      %v833 = vrot.slane %v831, 5
      %v834 = vsel %vm273, %v829, %v833
      %v835 = vshrl.u32 %v266, 16
      %v837 = vrot.slane %v835, 4
      %v838 = vor.u32 %v837, %v833
      %v839 = vrot.slane %v838, 4
      %v841 = vshll.u32 %v267, 16
      %v843 = vrot.slane %v841, 5
      %v844 = vsel %vm273, %v839, %v843
      %v848 = vrot.slane %v265, 5
      %v849 = vrot.slane %v848, 4
      %v850 = vrot.slane %v266, 5
      %v851 = vsel %vm708, %v849, %v850
      %v852 = vrot.slane %v850, 4
      %v853 = vrot.slane %v267, 5
      %v854 = vsel %vm708, %v852, %v853
      %v856 = vshrl.u32 %v268, 16
      %v858 = vrot.slane %v856, 4
      %v859 = vshll.u32 %v268, 16
      %v861 = vrot.slane %v859, 5
      %v862 = vor.u32 %v858, %v861
      %v863 = vrot.slane %v862, 4
      %v865 = vshll.u32 %v269, 16
      %v867 = vrot.slane %v865, 5
      %v868 = vsel %vm273, %v863, %v867
      %v869 = vshrl.u32 %v269, 16
      %v871 = vrot.slane %v869, 4
      %v872 = vor.u32 %v871, %v867
      %v873 = vrot.slane %v872, 4
      %v875 = vshll.u32 %v270, 16
      %v877 = vrot.slane %v875, 5
      %v878 = vsel %vm273, %v873, %v877
      %v882 = vrot.slane %v268, 5
      %v883 = vrot.slane %v882, 4
      %v884 = vrot.slane %v269, 5
      %v885 = vsel %vm708, %v883, %v884
      %v886 = vrot.slane %v884, 4
      %v887 = vrot.slane %v270, 5
      %v888 = vsel %vm708, %v886, %v887
      %v889 = vunpack.c.l.b16 %v217
      %v890 = vunpack.c.l.b16 %v218
      %v891 = vunpack.c.l.b16 %v220
      %v892 = vunpack.c.l.b16 %v221
      %v893 = vunpack.c.l.b16 %v223
      %v894 = vunpack.c.l.b16 %v224
      %v895 = vunpack.c.l.b16 %v226
      %v896 = vunpack.c.l.b16 %v227
      %v897 = vunpack.c.l.b16 %v229
      %v898 = vunpack.c.l.b16 %v230
      %v899 = vunpack.c.l.b16 %v232
      %v900 = vunpack.c.l.b16 %v233
      %v901 = vunpack.c.l.b16 %v235
      %v902 = vunpack.c.l.b16 %v236
      %v903 = vunpack.c.l.b16 %v238
      %v904 = vunpack.c.l.b16 %v239
      %v905 = vunpack.c.l.b16 %v241
      %v906 = vunpack.c.l.b16 %v242
      %v907 = vunpack.c.l.b16 %v244
      %v908 = vunpack.c.l.b16 %v245
      %v909 = vunpack.c.l.b16 %v247
      %v910 = vunpack.c.l.b16 %v248
      %v911 = vunpack.c.l.b16 %v250
      %v912 = vunpack.c.l.b16 %v251
      %v913 = vunpack.c.l.b16 %v253
      %v914 = vunpack.c.l.b16 %v254
      %v915 = vunpack.c.l.b16 %v256
      %v916 = vunpack.c.l.b16 %v257
      %v917 = vunpack.c.l.b16 %v259
      %v918 = vunpack.c.l.b16 %v260
      %v919 = vunpack.c.l.b16 %v262
      %v920 = vunpack.c.l.b16 %v263
      %v921 = vpack.c.b16 %v890, %v889
      %v922 = vpack.c.b16 %v892, %v891
      %v923 = vpack.c.b16 %v894, %v893
      %v924 = vpack.c.b16 %v896, %v895
      %v925 = vpack.c.b16 %v898, %v897
      %v926 = vpack.c.b16 %v900, %v899
      %v927 = vpack.c.b16 %v902, %v901
      %v928 = vpack.c.b16 %v904, %v903
      %v929 = vpack.c.b16 %v906, %v905
      %v930 = vpack.c.b16 %v908, %v907
      %v931 = vpack.c.b16 %v910, %v909
      %v932 = vpack.c.b16 %v912, %v911
      %v933 = vpack.c.b16 %v914, %v913
      %v934 = vpack.c.b16 %v916, %v915
      %v935 = vpack.c.b16 %v918, %v917
      %v936 = vpack.c.b16 %v920, %v919
      %v937 = vunpack.c.l.b16 %v287
      %v938 = vunpack.c.l.b16 %v297
      %v939 = vunpack.c.l.b16 %v311
      %v940 = vunpack.c.l.b16 %v321
      %v941 = vunpack.c.l.b16 %v335
      %v942 = vunpack.c.l.b16 %v345
      %v943 = vunpack.c.l.b16 %v359
      %v944 = vunpack.c.l.b16 %v369
      %v945 = vunpack.c.l.b16 %v383
      %v946 = vunpack.c.l.b16 %v393
      %v947 = vunpack.c.l.b16 %v407
      %v948 = vunpack.c.l.b16 %v417
      %v949 = vunpack.c.l.b16 %v431
      %v950 = vunpack.c.l.b16 %v441
      %v951 = vunpack.c.l.b16 %v455
      %v952 = vunpack.c.l.b16 %v465
      %v953 = vunpack.c.l.b16 %v479
      %v954 = vunpack.c.l.b16 %v489
      %v955 = vunpack.c.l.b16 %v503
      %v956 = vunpack.c.l.b16 %v513
      %v957 = vunpack.c.l.b16 %v527
      %v958 = vunpack.c.l.b16 %v537
      %v959 = vunpack.c.l.b16 %v551
      %v960 = vunpack.c.l.b16 %v561
      %v961 = vunpack.c.l.b16 %v575
      %v962 = vunpack.c.l.b16 %v585
      %v963 = vunpack.c.l.b16 %v599
      %v964 = vunpack.c.l.b16 %v609
      %v965 = vunpack.c.l.b16 %v623
      %v966 = vunpack.c.l.b16 %v633
      %v967 = vunpack.c.l.b16 %v647
      %v968 = vunpack.c.l.b16 %v657
      %v969 = vpack.c.b16 %v938, %v937
      %v970 = vpack.c.b16 %v940, %v939
      %v971 = vpack.c.b16 %v942, %v941
      %v972 = vpack.c.b16 %v944, %v943
      %v973 = vpack.c.b16 %v946, %v945
      %v974 = vpack.c.b16 %v948, %v947
      %v975 = vpack.c.b16 %v950, %v949
      %v976 = vpack.c.b16 %v952, %v951
      %v977 = vpack.c.b16 %v954, %v953
      %v978 = vpack.c.b16 %v956, %v955
      %v979 = vpack.c.b16 %v958, %v957
      %v980 = vpack.c.b16 %v960, %v959
      %v981 = vpack.c.b16 %v962, %v961
      %v982 = vpack.c.b16 %v964, %v963
      %v983 = vpack.c.b16 %v966, %v965
      %v984 = vpack.c.b16 %v968, %v967
      %985 = vrot.lane.b32.xlu0 %v969, 4
      %v986 = vpop.permute.xlu0 %985
      %987 = vrot.lane.b32.xlu0 %v970, 4
      %v988 = vpop.permute.xlu0 %987
      %989 = vrot.lane.b32.xlu0 %v971, 4
      %v990 = vpop.permute.xlu0 %989
      %991 = vrot.lane.b32.xlu0 %v972, 4
      %v992 = vpop.permute.xlu0 %991
      %993 = vrot.lane.b32.xlu0 %v973, 4
      %v994 = vpop.permute.xlu0 %993
      %995 = vrot.lane.b32.xlu0 %v974, 4
      %v996 = vpop.permute.xlu0 %995
      %997 = vrot.lane.b32.xlu0 %v975, 4
      %v998 = vpop.permute.xlu0 %997
      %999 = vrot.lane.b32.xlu0 %v976, 4
      %v1000 = vpop.permute.xlu0 %999
      %1001 = vrot.lane.b32.xlu0 %v977, 4
      %v1002 = vpop.permute.xlu0 %1001
      %1003 = vrot.lane.b32.xlu0 %v978, 4
      %v1004 = vpop.permute.xlu0 %1003
      %1005 = vrot.lane.b32.xlu0 %v979, 4
      %v1006 = vpop.permute.xlu0 %1005
      %1007 = vrot.lane.b32.xlu0 %v980, 4
      %v1008 = vpop.permute.xlu0 %1007
      %1009 = vrot.lane.b32.xlu0 %v981, 4
      %v1010 = vpop.permute.xlu0 %1009
      %1011 = vrot.lane.b32.xlu0 %v982, 4
      %v1012 = vpop.permute.xlu0 %1011
      %1013 = vrot.lane.b32.xlu0 %v983, 4
      %v1014 = vpop.permute.xlu0 %1013
      %1015 = vrot.lane.b32.xlu0 %v984, 4
      %v1016 = vpop.permute.xlu0 %1015
      %v1017 = vunpack.c.l.b16 %v712
      %v1018 = vunpack.c.l.b16 %v715
      %v1019 = vunpack.c.l.b16 %v719
      %v1020 = vunpack.c.l.b16 %v722
      %v1021 = vunpack.c.l.b16 %v726
      %v1022 = vunpack.c.l.b16 %v729
      %v1023 = vunpack.c.l.b16 %v733
      %v1024 = vunpack.c.l.b16 %v736
      %v1025 = vunpack.c.l.b16 %v740
      %v1026 = vunpack.c.l.b16 %v743
      %v1027 = vunpack.c.l.b16 %v747
      %v1028 = vunpack.c.l.b16 %v750
      %v1029 = vunpack.c.l.b16 %v754
      %v1030 = vunpack.c.l.b16 %v757
      %v1031 = vunpack.c.l.b16 %v761
      %v1032 = vunpack.c.l.b16 %v764
      %v1033 = vunpack.c.l.b16 %v768
      %v1034 = vunpack.c.l.b16 %v771
      %v1035 = vunpack.c.l.b16 %v775
      %v1036 = vunpack.c.l.b16 %v778
      %v1037 = vunpack.c.l.b16 %v782
      %v1038 = vunpack.c.l.b16 %v785
      %v1039 = vunpack.c.l.b16 %v789
      %v1040 = vunpack.c.l.b16 %v792
      %v1041 = vunpack.c.l.b16 %v796
      %v1042 = vunpack.c.l.b16 %v799
      %v1043 = vunpack.c.l.b16 %v803
      %v1044 = vunpack.c.l.b16 %v806
      %v1045 = vunpack.c.l.b16 %v810
      %v1046 = vunpack.c.l.b16 %v813
      %v1047 = vunpack.c.l.b16 %v817
      %v1048 = vunpack.c.l.b16 %v820
      %v1049 = vpack.c.b16 %v1018, %v1017
      %v1050 = vpack.c.b16 %v1020, %v1019
      %v1051 = vpack.c.b16 %v1022, %v1021
      %v1052 = vpack.c.b16 %v1024, %v1023
      %v1053 = vpack.c.b16 %v1026, %v1025
      %v1054 = vpack.c.b16 %v1028, %v1027
      %v1055 = vpack.c.b16 %v1030, %v1029
      %v1056 = vpack.c.b16 %v1032, %v1031
      %v1057 = vpack.c.b16 %v1034, %v1033
      %v1058 = vpack.c.b16 %v1036, %v1035
      %v1059 = vpack.c.b16 %v1038, %v1037
      %v1060 = vpack.c.b16 %v1040, %v1039
      %v1061 = vpack.c.b16 %v1042, %v1041
      %v1062 = vpack.c.b16 %v1044, %v1043
      %v1063 = vpack.c.b16 %v1046, %v1045
      %v1064 = vpack.c.b16 %v1048, %v1047
      %1065 = vrot.lane.b32.xlu0 %v1049, 8
      %v1066 = vpop.permute.xlu0 %1065
      %1067 = vrot.lane.b32.xlu0 %v1050, 8
      %v1068 = vpop.permute.xlu0 %1067
      %1069 = vrot.lane.b32.xlu0 %v1051, 8
      %v1070 = vpop.permute.xlu0 %1069
      %1071 = vrot.lane.b32.xlu0 %v1052, 8
      %v1072 = vpop.permute.xlu0 %1071
      %1073 = vrot.lane.b32.xlu0 %v1053, 8
      %v1074 = vpop.permute.xlu0 %1073
      %1075 = vrot.lane.b32.xlu0 %v1054, 8
      %v1076 = vpop.permute.xlu0 %1075
      %1077 = vrot.lane.b32.xlu0 %v1055, 8
      %v1078 = vpop.permute.xlu0 %1077
      %1079 = vrot.lane.b32.xlu0 %v1056, 8
      %v1080 = vpop.permute.xlu0 %1079
      %1081 = vrot.lane.b32.xlu0 %v1057, 8
      %v1082 = vpop.permute.xlu0 %1081
      %1083 = vrot.lane.b32.xlu0 %v1058, 8
      %v1084 = vpop.permute.xlu0 %1083
      %1085 = vrot.lane.b32.xlu0 %v1059, 8
      %v1086 = vpop.permute.xlu0 %1085
      %1087 = vrot.lane.b32.xlu0 %v1060, 8
      %v1088 = vpop.permute.xlu0 %1087
      %1089 = vrot.lane.b32.xlu0 %v1061, 8
      %v1090 = vpop.permute.xlu0 %1089
      %1091 = vrot.lane.b32.xlu0 %v1062, 8
      %v1092 = vpop.permute.xlu0 %1091
      %1093 = vrot.lane.b32.xlu0 %v1063, 8
      %v1094 = vpop.permute.xlu0 %1093
      %1095 = vrot.lane.b32.xlu0 %v1064, 8
      %v1096 = vpop.permute.xlu0 %1095
      %v1097 = vunpack.c.l.b16 %v265
      %v1098 = vunpack.c.l.b16 %v266
      %v1099 = vpack.c.b16 %v1098, %v1097
      %1100 = vrot.lane.b32.xlu0 %v922, 12
      %v1101 = vpop.permute.xlu0 %1100
      %1102 = vrot.lane.b32.xlu0 %v923, 12
      %v1103 = vpop.permute.xlu0 %1102
      %1104 = vrot.lane.b32.xlu0 %v924, 12
      %v1105 = vpop.permute.xlu0 %1104
      %1106 = vrot.lane.b32.xlu0 %v925, 12
      %v1107 = vpop.permute.xlu0 %1106
      %1108 = vrot.lane.b32.xlu0 %v926, 12
      %v1109 = vpop.permute.xlu0 %1108
      %1110 = vrot.lane.b32.xlu0 %v927, 12
      %v1111 = vpop.permute.xlu0 %1110
      %1112 = vrot.lane.b32.xlu0 %v928, 12
      %v1113 = vpop.permute.xlu0 %1112
      %1114 = vrot.lane.b32.xlu0 %v929, 12
      %v1115 = vpop.permute.xlu0 %1114
      %1116 = vrot.lane.b32.xlu0 %v930, 12
      %v1117 = vpop.permute.xlu0 %1116
      %1118 = vrot.lane.b32.xlu0 %v931, 12
      %v1119 = vpop.permute.xlu0 %1118
      %1120 = vrot.lane.b32.xlu0 %v932, 12
      %v1121 = vpop.permute.xlu0 %1120
      %1122 = vrot.lane.b32.xlu0 %v933, 12
      %v1123 = vpop.permute.xlu0 %1122
      %1124 = vrot.lane.b32.xlu0 %v934, 12
      %v1125 = vpop.permute.xlu0 %1124
      %1126 = vrot.lane.b32.xlu0 %v935, 12
      %v1127 = vpop.permute.xlu0 %1126
      %1128 = vrot.lane.b32.xlu0 %v936, 12
      %v1129 = vpop.permute.xlu0 %1128
      %1130 = vrot.lane.b32.xlu0 %v1099, 12
      %v1131 = vpop.permute.xlu0 %1130
      %v1132 = vunpack.c.l.b16 %v834
      %v1133 = vunpack.c.l.b16 %v844
      %v1134 = vpack.c.b16 %v1133, %v1132
      %1135 = vrot.lane.b32.xlu0 %v970, 16
      %v1136 = vpop.permute.xlu0 %1135
      %1137 = vrot.lane.b32.xlu0 %v971, 16
      %v1138 = vpop.permute.xlu0 %1137
      %1139 = vrot.lane.b32.xlu0 %v972, 16
      %v1140 = vpop.permute.xlu0 %1139
      %1141 = vrot.lane.b32.xlu0 %v973, 16
      %v1142 = vpop.permute.xlu0 %1141
      %1143 = vrot.lane.b32.xlu0 %v974, 16
      %v1144 = vpop.permute.xlu0 %1143
      %1145 = vrot.lane.b32.xlu0 %v975, 16
      %v1146 = vpop.permute.xlu0 %1145
      %1147 = vrot.lane.b32.xlu0 %v976, 16
      %v1148 = vpop.permute.xlu0 %1147
      %1149 = vrot.lane.b32.xlu0 %v977, 16
      %v1150 = vpop.permute.xlu0 %1149
      %1151 = vrot.lane.b32.xlu0 %v978, 16
      %v1152 = vpop.permute.xlu0 %1151
      %1153 = vrot.lane.b32.xlu0 %v979, 16
      %v1154 = vpop.permute.xlu0 %1153
      %1155 = vrot.lane.b32.xlu0 %v980, 16
      %v1156 = vpop.permute.xlu0 %1155
      %1157 = vrot.lane.b32.xlu0 %v981, 16
      %v1158 = vpop.permute.xlu0 %1157
      %1159 = vrot.lane.b32.xlu0 %v982, 16
      %v1160 = vpop.permute.xlu0 %1159
      %1161 = vrot.lane.b32.xlu0 %v983, 16
      %v1162 = vpop.permute.xlu0 %1161
      %1163 = vrot.lane.b32.xlu0 %v984, 16
      %v1164 = vpop.permute.xlu0 %1163
      %1165 = vrot.lane.b32.xlu0 %v1134, 16
      %v1166 = vpop.permute.xlu0 %1165
      %v1167 = vunpack.c.l.b16 %v851
      %v1168 = vunpack.c.l.b16 %v854
      %v1169 = vpack.c.b16 %v1168, %v1167
      %1170 = vrot.lane.b32.xlu0 %v1050, 20
      %v1171 = vpop.permute.xlu0 %1170
      %1172 = vrot.lane.b32.xlu0 %v1051, 20
      %v1173 = vpop.permute.xlu0 %1172
      %1174 = vrot.lane.b32.xlu0 %v1052, 20
      %v1175 = vpop.permute.xlu0 %1174
      %1176 = vrot.lane.b32.xlu0 %v1053, 20
      %v1177 = vpop.permute.xlu0 %1176
      %1178 = vrot.lane.b32.xlu0 %v1054, 20
      %v1179 = vpop.permute.xlu0 %1178
      %1180 = vrot.lane.b32.xlu0 %v1055, 20
      %v1181 = vpop.permute.xlu0 %1180
      %1182 = vrot.lane.b32.xlu0 %v1056, 20
      %v1183 = vpop.permute.xlu0 %1182
      %1184 = vrot.lane.b32.xlu0 %v1057, 20
      %v1185 = vpop.permute.xlu0 %1184
      %1186 = vrot.lane.b32.xlu0 %v1058, 20
      %v1187 = vpop.permute.xlu0 %1186
      %1188 = vrot.lane.b32.xlu0 %v1059, 20
      %v1189 = vpop.permute.xlu0 %1188
      %1190 = vrot.lane.b32.xlu0 %v1060, 20
      %v1191 = vpop.permute.xlu0 %1190
      %1192 = vrot.lane.b32.xlu0 %v1061, 20
      %v1193 = vpop.permute.xlu0 %1192
      %1194 = vrot.lane.b32.xlu0 %v1062, 20
      %v1195 = vpop.permute.xlu0 %1194
      %1196 = vrot.lane.b32.xlu0 %v1063, 20
      %v1197 = vpop.permute.xlu0 %1196
      %1198 = vrot.lane.b32.xlu0 %v1064, 20
      %v1199 = vpop.permute.xlu0 %1198
      %1200 = vrot.lane.b32.xlu0 %v1169, 20
      %v1201 = vpop.permute.xlu0 %1200
      %v1202 = vunpack.c.l.b16 %v268
      %v1203 = vunpack.c.l.b16 %v269
      %v1204 = vpack.c.b16 %v1203, %v1202
      %1205 = vrot.lane.b32.xlu0 %v923, 24
      %v1206 = vpop.permute.xlu0 %1205
      %1207 = vrot.lane.b32.xlu0 %v924, 24
      %v1208 = vpop.permute.xlu0 %1207
      %1209 = vrot.lane.b32.xlu0 %v925, 24
      %v1210 = vpop.permute.xlu0 %1209
      %1211 = vrot.lane.b32.xlu0 %v926, 24
      %v1212 = vpop.permute.xlu0 %1211
      %1213 = vrot.lane.b32.xlu0 %v927, 24
      %v1214 = vpop.permute.xlu0 %1213
      %1215 = vrot.lane.b32.xlu0 %v928, 24
      %v1216 = vpop.permute.xlu0 %1215
      %1217 = vrot.lane.b32.xlu0 %v929, 24
      %v1218 = vpop.permute.xlu0 %1217
      %1219 = vrot.lane.b32.xlu0 %v930, 24
      %v1220 = vpop.permute.xlu0 %1219
      %1221 = vrot.lane.b32.xlu0 %v931, 24
      %v1222 = vpop.permute.xlu0 %1221
      %1223 = vrot.lane.b32.xlu0 %v932, 24
      %v1224 = vpop.permute.xlu0 %1223
      %1225 = vrot.lane.b32.xlu0 %v933, 24
      %v1226 = vpop.permute.xlu0 %1225
      %1227 = vrot.lane.b32.xlu0 %v934, 24
      %v1228 = vpop.permute.xlu0 %1227
      %1229 = vrot.lane.b32.xlu0 %v935, 24
      %v1230 = vpop.permute.xlu0 %1229
      %1231 = vrot.lane.b32.xlu0 %v936, 24
      %v1232 = vpop.permute.xlu0 %1231
      %1233 = vrot.lane.b32.xlu0 %v1099, 24
      %v1234 = vpop.permute.xlu0 %1233
      %1235 = vrot.lane.b32.xlu0 %v1204, 24
      %v1236 = vpop.permute.xlu0 %1235
      %v1237 = vunpack.c.l.b16 %v868
      %v1238 = vunpack.c.l.b16 %v878
      %v1239 = vpack.c.b16 %v1238, %v1237
      %1240 = vrot.lane.b32.xlu0 %v971, 28
      %v1241 = vpop.permute.xlu0 %1240
      %1242 = vrot.lane.b32.xlu0 %v972, 28
      %v1243 = vpop.permute.xlu0 %1242
      %1244 = vrot.lane.b32.xlu0 %v973, 28
      %v1245 = vpop.permute.xlu0 %1244
      %1246 = vrot.lane.b32.xlu0 %v974, 28
      %v1247 = vpop.permute.xlu0 %1246
      %1248 = vrot.lane.b32.xlu0 %v975, 28
      %v1249 = vpop.permute.xlu0 %1248
      %1250 = vrot.lane.b32.xlu0 %v976, 28
      %v1251 = vpop.permute.xlu0 %1250
      %1252 = vrot.lane.b32.xlu0 %v977, 28
      %v1253 = vpop.permute.xlu0 %1252
      %1254 = vrot.lane.b32.xlu0 %v978, 28
      %v1255 = vpop.permute.xlu0 %1254
      %1256 = vrot.lane.b32.xlu0 %v979, 28
      %v1257 = vpop.permute.xlu0 %1256
      %1258 = vrot.lane.b32.xlu0 %v980, 28
      %v1259 = vpop.permute.xlu0 %1258
      %1260 = vrot.lane.b32.xlu0 %v981, 28
      %v1261 = vpop.permute.xlu0 %1260
      %1262 = vrot.lane.b32.xlu0 %v982, 28
      %v1263 = vpop.permute.xlu0 %1262
      %1264 = vrot.lane.b32.xlu0 %v983, 28
      %v1265 = vpop.permute.xlu0 %1264
      %1266 = vrot.lane.b32.xlu0 %v984, 28
      %v1267 = vpop.permute.xlu0 %1266
      %1268 = vrot.lane.b32.xlu0 %v1134, 28
      %v1269 = vpop.permute.xlu0 %1268
      %1270 = vrot.lane.b32.xlu0 %v1239, 28
      %v1271 = vpop.permute.xlu0 %1270
      %v1272 = vunpack.c.l.b16 %v885
      %v1273 = vunpack.c.l.b16 %v888
      %v1274 = vpack.c.b16 %v1273, %v1272
      %1275 = vrot.lane.b32.xlu0 %v1051, 32
      %v1276 = vpop.permute.xlu0 %1275
      %1277 = vrot.lane.b32.xlu0 %v1052, 32
      %v1278 = vpop.permute.xlu0 %1277
      %1279 = vrot.lane.b32.xlu0 %v1053, 32
      %v1280 = vpop.permute.xlu0 %1279
      %1281 = vrot.lane.b32.xlu0 %v1054, 32
      %v1282 = vpop.permute.xlu0 %1281
      %1283 = vrot.lane.b32.xlu0 %v1055, 32
      %v1284 = vpop.permute.xlu0 %1283
      %1285 = vrot.lane.b32.xlu0 %v1056, 32
      %v1286 = vpop.permute.xlu0 %1285
      %1287 = vrot.lane.b32.xlu0 %v1057, 32
      %v1288 = vpop.permute.xlu0 %1287
      %1289 = vrot.lane.b32.xlu0 %v1058, 32
      %v1290 = vpop.permute.xlu0 %1289
      %1291 = vrot.lane.b32.xlu0 %v1059, 32
      %v1292 = vpop.permute.xlu0 %1291
      %1293 = vrot.lane.b32.xlu0 %v1060, 32
      %v1294 = vpop.permute.xlu0 %1293
      %1295 = vrot.lane.b32.xlu0 %v1061, 32
      %v1296 = vpop.permute.xlu0 %1295
      %1297 = vrot.lane.b32.xlu0 %v1062, 32
      %v1298 = vpop.permute.xlu0 %1297
      %1299 = vrot.lane.b32.xlu0 %v1063, 32
      %v1300 = vpop.permute.xlu0 %1299
      %1301 = vrot.lane.b32.xlu0 %v1064, 32
      %v1302 = vpop.permute.xlu0 %1301
      %1303 = vrot.lane.b32.xlu0 %v1169, 32
      %v1304 = vpop.permute.xlu0 %1303
      %1305 = vrot.lane.b32.xlu0 %v1274, 32
      %v1306 = vpop.permute.xlu0 %1305
      %vm1307 = vcmask 31744
      %v1310 = vsel %vm1307, %v921, %v986
      %v1313 = vsel %vm1307, %v922, %v988
      %v1316 = vsel %vm1307, %v923, %v990
      %v1319 = vsel %vm1307, %v924, %v992
      %v1322 = vsel %vm1307, %v925, %v994
      %v1325 = vsel %vm1307, %v926, %v996
      %v1328 = vsel %vm1307, %v927, %v998
      %v1331 = vsel %vm1307, %v928, %v1000
      %v1334 = vsel %vm1307, %v929, %v1002
      %v1337 = vsel %vm1307, %v930, %v1004
      %v1340 = vsel %vm1307, %v931, %v1006
      %v1343 = vsel %vm1307, %v932, %v1008
      %v1346 = vsel %vm1307, %v933, %v1010
      %v1349 = vsel %vm1307, %v934, %v1012
      %v1352 = vsel %vm1307, %v935, %v1014
      %v1355 = vsel %vm1307, %v936, %v1016
      %vm1356 = vcmask 64512
      %v1358 = vsel %vm1356, %v1310, %v1066
      %v1360 = vsel %vm1356, %v1313, %v1068
      %v1362 = vsel %vm1356, %v1316, %v1070
      %v1364 = vsel %vm1356, %v1319, %v1072
      %v1366 = vsel %vm1356, %v1322, %v1074
      %v1368 = vsel %vm1356, %v1325, %v1076
      %v1370 = vsel %vm1356, %v1328, %v1078
      %v1372 = vsel %vm1356, %v1331, %v1080
      %v1374 = vsel %vm1356, %v1334, %v1082
      %v1376 = vsel %vm1356, %v1337, %v1084
      %v1378 = vsel %vm1356, %v1340, %v1086
      %v1380 = vsel %vm1356, %v1343, %v1088
      %v1382 = vsel %vm1356, %v1346, %v1090
      %v1384 = vsel %vm1356, %v1349, %v1092
      %v1386 = vsel %vm1356, %v1352, %v1094
      %v1388 = vsel %vm1356, %v1355, %v1096
      %vm1389 = vcmask 97280
      %v1391 = vsel %vm1389, %v1358, %v1101
      %v1393 = vsel %vm1389, %v1360, %v1103
      %v1395 = vsel %vm1389, %v1362, %v1105
      %v1397 = vsel %vm1389, %v1364, %v1107
      %v1399 = vsel %vm1389, %v1366, %v1109
      %v1401 = vsel %vm1389, %v1368, %v1111
      %v1403 = vsel %vm1389, %v1370, %v1113
      %v1405 = vsel %vm1389, %v1372, %v1115
      %v1407 = vsel %vm1389, %v1374, %v1117
      %v1409 = vsel %vm1389, %v1376, %v1119
      %v1411 = vsel %vm1389, %v1378, %v1121
      %v1413 = vsel %vm1389, %v1380, %v1123
      %v1415 = vsel %vm1389, %v1382, %v1125
      %v1417 = vsel %vm1389, %v1384, %v1127
      %v1419 = vsel %vm1389, %v1386, %v1129
      %v1421 = vsel %vm1389, %v1388, %v1131
      %vm1422 = vcmask 130048
      %v1424 = vsel %vm1422, %v1391, %v1136
      %v1426 = vsel %vm1422, %v1393, %v1138
      %v1428 = vsel %vm1422, %v1395, %v1140
      %v1430 = vsel %vm1422, %v1397, %v1142
      %v1432 = vsel %vm1422, %v1399, %v1144
      %v1434 = vsel %vm1422, %v1401, %v1146
      %v1436 = vsel %vm1422, %v1403, %v1148
      %v1438 = vsel %vm1422, %v1405, %v1150
      %v1440 = vsel %vm1422, %v1407, %v1152
      %v1442 = vsel %vm1422, %v1409, %v1154
      %v1444 = vsel %vm1422, %v1411, %v1156
      %v1446 = vsel %vm1422, %v1413, %v1158
      %v1448 = vsel %vm1422, %v1415, %v1160
      %v1450 = vsel %vm1422, %v1417, %v1162
      %v1452 = vsel %vm1422, %v1419, %v1164
      %v1454 = vsel %vm1422, %v1421, %v1166
      %vm1455 = vcmask 162816
      %v1457 = vsel %vm1455, %v1424, %v1171
      %v1459 = vsel %vm1455, %v1426, %v1173
      %v1461 = vsel %vm1455, %v1428, %v1175
      %v1463 = vsel %vm1455, %v1430, %v1177
      %v1465 = vsel %vm1455, %v1432, %v1179
      %v1467 = vsel %vm1455, %v1434, %v1181
      %v1469 = vsel %vm1455, %v1436, %v1183
      %v1471 = vsel %vm1455, %v1438, %v1185
      %v1473 = vsel %vm1455, %v1440, %v1187
      %v1475 = vsel %vm1455, %v1442, %v1189
      %v1477 = vsel %vm1455, %v1444, %v1191
      %v1479 = vsel %vm1455, %v1446, %v1193
      %v1481 = vsel %vm1455, %v1448, %v1195
      %v1483 = vsel %vm1455, %v1450, %v1197
      %v1485 = vsel %vm1455, %v1452, %v1199
      %v1487 = vsel %vm1455, %v1454, %v1201
      %vm1488 = vcmask 195584
      %v1490 = vsel %vm1488, %v1457, %v1206
      %v1492 = vsel %vm1488, %v1459, %v1208
      %v1494 = vsel %vm1488, %v1461, %v1210
      %v1496 = vsel %vm1488, %v1463, %v1212
      %v1498 = vsel %vm1488, %v1465, %v1214
      %v1500 = vsel %vm1488, %v1467, %v1216
      %v1502 = vsel %vm1488, %v1469, %v1218
      %v1504 = vsel %vm1488, %v1471, %v1220
      %v1506 = vsel %vm1488, %v1473, %v1222
      %v1508 = vsel %vm1488, %v1475, %v1224
      %v1510 = vsel %vm1488, %v1477, %v1226
      %v1512 = vsel %vm1488, %v1479, %v1228
      %v1514 = vsel %vm1488, %v1481, %v1230
      %v1516 = vsel %vm1488, %v1483, %v1232
      %v1518 = vsel %vm1488, %v1485, %v1234
      %v1520 = vsel %vm1488, %v1487, %v1236
      %vm1521 = vcmask 228352
      %v1523 = vsel %vm1521, %v1490, %v1241
      %v1525 = vsel %vm1521, %v1492, %v1243
      %v1527 = vsel %vm1521, %v1494, %v1245
      %v1529 = vsel %vm1521, %v1496, %v1247
      %v1531 = vsel %vm1521, %v1498, %v1249
      %v1533 = vsel %vm1521, %v1500, %v1251
      %v1535 = vsel %vm1521, %v1502, %v1253
      %v1537 = vsel %vm1521, %v1504, %v1255
      %v1539 = vsel %vm1521, %v1506, %v1257
      %v1541 = vsel %vm1521, %v1508, %v1259
      %v1543 = vsel %vm1521, %v1510, %v1261
      %v1545 = vsel %vm1521, %v1512, %v1263
      %v1547 = vsel %vm1521, %v1514, %v1265
      %v1549 = vsel %vm1521, %v1516, %v1267
      %v1551 = vsel %vm1521, %v1518, %v1269
      %v1553 = vsel %vm1521, %v1520, %v1271
      %vm1554 = vcmask 261120
      %v1556 = vsel %vm1554, %v1523, %v1276
      %v1558 = vsel %vm1554, %v1525, %v1278
      %v1560 = vsel %vm1554, %v1527, %v1280
      %v1562 = vsel %vm1554, %v1529, %v1282
      %v1564 = vsel %vm1554, %v1531, %v1284
      %v1566 = vsel %vm1554, %v1533, %v1286
      %v1568 = vsel %vm1554, %v1535, %v1288
      %v1570 = vsel %vm1554, %v1537, %v1290
      %v1572 = vsel %vm1554, %v1539, %v1292
      %v1574 = vsel %vm1554, %v1541, %v1294
      %v1576 = vsel %vm1554, %v1543, %v1296
      %v1578 = vsel %vm1554, %v1545, %v1298
      %v1580 = vsel %vm1554, %v1547, %v1300
      %v1582 = vsel %vm1554, %v1549, %v1302
      %v1584 = vsel %vm1554, %v1551, %v1304
      %v1586 = vsel %vm1554, %v1553, %v1306
      %v1587 = vld [vmem:[%s1] sm:$0xf]
      %v1588 = vld [vmem:[%s1 + $0x4] sm:$0xf]
      %v1589 = vld [vmem:[%s1 + $0x8] sm:$0xf]
      %v1590 = vld [vmem:[%s1 + $0xc] sm:$0xf]
      %v1591 = vld [vmem:[%s1 + $0x10] sm:$0x3]
      %v1597 = vunpack.c.l.b16 %v1587
      %v1598 = vunpack.c.l.b16 %v1588
      %v1599 = vunpack.c.l.b16 %v1589
      %v1600 = vunpack.c.l.b16 %v1590
      %v1601 = vunpack.c.l.b16 %v1591
      %v1602 = vpack.c.b16 %v1598, %v1597
      %v1603 = vpack.c.b16 %v1600, %v1599
      %v1604 = vpack.c.b16 %v1601, %v1601
      %vm1607 = vcmask 293888
      %v1608 = vsel %vm1607, %v1556, 0
      %v1610 = vsel %vm1607, %v1558, 0
      %v1612 = vsel %vm1607, %v1560, 0
      %v1614 = vsel %vm1607, %v1562, 0
      %v1616 = vsel %vm1607, %v1564, 0
      %v1618 = vsel %vm1607, %v1566, 0
      %v1620 = vsel %vm1607, %v1568, 0
      %v1622 = vsel %vm1607, %v1570, 0
      %v1624 = vsel %vm1607, %v1572, 0
      %v1626 = vsel %vm1607, %v1574, 0
      %v1628 = vsel %vm1607, %v1576, 0
      %v1630 = vsel %vm1607, %v1578, 0
      %v1632 = vsel %vm1607, %v1580, 0
      %v1634 = vsel %vm1607, %v1582, 0
      %v1636 = vsel %vm1607, %v1584, 0
      %v1638 = vsel %vm1607, %v1586, 0
      %vm1640 = vcmask 1041408
      %v1642 = vsel %vm1640, %v1604, 0
      %1644 = vmatprep.subr.bf16.mxu0 0
      %1645 = vmatpush1.bf16.msra.mxu0 %v1602
      %1646 = vmatprep.subr.bf16.mxu0 0
      %1647 = vmatpush1.bf16.msra.mxu0 %v1603
      %1648 = vmatprep.subr.bf16.mxu0 0
      %1649 = vmatpush1.bf16.msra.mxu0 %v1642
      %1650 = vmatprep.subr.bf16.mxu0 0
      %1651 = vmatpush1.bf16.msra.mxu0 0
      %1652 = vmatprep.subr.bf16.mxu0 0
      %1653 = vmatpush1.bf16.msra.mxu0 0
      %1654 = vmatprep.subr.bf16.mxu0 0
      %1655 = vmatpush1.bf16.msra.mxu0 0
      %1656 = vmatprep.subr.bf16.mxu0 0
      %1657 = vmatpush1.bf16.msra.mxu0 0
      %1658 = vmatprep.subr.bf16.mxu0 0
      %1659 = vmatpush1.bf16.msra.mxu0 0
      %1660 = vmatprep.subr.bf16.mxu0 0
      %1661 = vmatpush1.bf16.msra.mxu0 0
      %1662 = vmatprep.subr.bf16.mxu0 0
      %1663 = vmatpush1.bf16.msra.mxu0 0
      %1664 = vmatprep.subr.bf16.mxu0 0
      %1665 = vmatpush1.bf16.msra.mxu0 0
      %1666 = vmatprep.subr.bf16.mxu0 0
      %1667 = vmatpush1.bf16.msra.mxu0 0
      %1668 = vmatprep.subr.bf16.mxu0 0
      %1669 = vmatpush1.bf16.msra.mxu0 0
      %1670 = vmatprep.subr.bf16.mxu0 0
      %1671 = vmatpush1.bf16.msra.mxu0 0
      %1672 = vmatprep.subr.bf16.mxu0 0
      %1673 = vmatpush1.bf16.msra.mxu0 0
      %1674 = vmatprep.subr.bf16.mxu0 0
      %1675 = vmatpush1.bf16.msra.mxu0 0
      %1676 = vmatprep.mubr.bf16.mxu0 0
      %1677 = vmatmul.mubr.bf16.gmra.mrb[0].mxu0 %v1608
      %v1678 = vpop.f32.mrb[0].mxu0
      %v1679 = vadd.f32 0.0, %v1678
      %v1680 = vpop.f32.mrb[0].mxu0
      %v1681 = vpop.f32.mrb[0].mxu0
      %v1682 = vadd.f32 0.0, %v1681
      %v1683 = vpop.f32.mrb[0].mxu0
      %1684 = vmatprep.mubr.bf16.mxu0 0
      %1685 = vmatmul.mubr.bf16.gmra.mrb[0].mxu0 %v1610
      %v1686 = vpop.f32.mrb[0].mxu0
      %v1687 = vadd.f32 0.0, %v1686
      %v1688 = vpop.f32.mrb[0].mxu0
      %v1689 = vpop.f32.mrb[0].mxu0
      %v1690 = vadd.f32 0.0, %v1689
      %v1691 = vpop.f32.mrb[0].mxu0
      %1692 = vmatprep.mubr.bf16.mxu0 0
      %1693 = vmatmul.mubr.bf16.gmra.mrb[0].mxu0 %v1612
      %v1694 = vpop.f32.mrb[0].mxu0
      %v1695 = vadd.f32 0.0, %v1694
      %v1696 = vpop.f32.mrb[0].mxu0
      %v1697 = vpop.f32.mrb[0].mxu0
      %v1698 = vadd.f32 0.0, %v1697
      %v1699 = vpop.f32.mrb[0].mxu0
      %1700 = vmatprep.mubr.bf16.mxu0 0
      %1701 = vmatmul.mubr.bf16.gmra.mrb[0].mxu0 %v1614
      %v1702 = vpop.f32.mrb[0].mxu0
      %v1703 = vadd.f32 0.0, %v1702
      %v1704 = vpop.f32.mrb[0].mxu0
      %v1705 = vpop.f32.mrb[0].mxu0
      %v1706 = vadd.f32 0.0, %v1705
      %v1707 = vpop.f32.mrb[0].mxu0
      %1708 = vmatprep.mubr.bf16.mxu0 0
      %1709 = vmatmul.mubr.bf16.gmra.mrb[0].mxu0 %v1616
      %v1710 = vpop.f32.mrb[0].mxu0
      %v1711 = vadd.f32 0.0, %v1710
      %v1712 = vpop.f32.mrb[0].mxu0
      %v1713 = vpop.f32.mrb[0].mxu0
      %v1714 = vadd.f32 0.0, %v1713
      %v1715 = vpop.f32.mrb[0].mxu0
      %1716 = vmatprep.mubr.bf16.mxu0 0
      %1717 = vmatmul.mubr.bf16.gmra.mrb[0].mxu0 %v1618
      %v1718 = vpop.f32.mrb[0].mxu0
      %v1719 = vadd.f32 0.0, %v1718
      %v1720 = vpop.f32.mrb[0].mxu0
      %v1721 = vpop.f32.mrb[0].mxu0
      %v1722 = vadd.f32 0.0, %v1721
      %v1723 = vpop.f32.mrb[0].mxu0
      %1724 = vmatprep.mubr.bf16.mxu0 0
      %1725 = vmatmul.mubr.bf16.gmra.mrb[0].mxu0 %v1620
      %v1726 = vpop.f32.mrb[0].mxu0
      %v1727 = vadd.f32 0.0, %v1726
      %v1728 = vpop.f32.mrb[0].mxu0
      %v1729 = vpop.f32.mrb[0].mxu0
      %v1730 = vadd.f32 0.0, %v1729
      %v1731 = vpop.f32.mrb[0].mxu0
      %1732 = vmatprep.mubr.bf16.mxu0 0
      %1733 = vmatmul.mubr.bf16.gmra.mrb[0].mxu0 %v1622
      %v1734 = vpop.f32.mrb[0].mxu0
      %v1735 = vadd.f32 0.0, %v1734
      %v1736 = vpop.f32.mrb[0].mxu0
      %v1737 = vpop.f32.mrb[0].mxu0
      %v1738 = vadd.f32 0.0, %v1737
      %v1739 = vpop.f32.mrb[0].mxu0
      %1740 = vmatprep.mubr.bf16.mxu0 0
      %1741 = vmatmul.mubr.bf16.gmra.mrb[0].mxu0 %v1624
      %v1742 = vpop.f32.mrb[0].mxu0
      %v1743 = vadd.f32 0.0, %v1742
      %v1744 = vpop.f32.mrb[0].mxu0
      %v1745 = vpop.f32.mrb[0].mxu0
      %v1746 = vadd.f32 0.0, %v1745
      %v1747 = vpop.f32.mrb[0].mxu0
      %1748 = vmatprep.mubr.bf16.mxu0 0
      %1749 = vmatmul.mubr.bf16.gmra.mrb[0].mxu0 %v1626
      %v1750 = vpop.f32.mrb[0].mxu0
      %v1751 = vadd.f32 0.0, %v1750
      %v1752 = vpop.f32.mrb[0].mxu0
      %v1753 = vpop.f32.mrb[0].mxu0
      %v1754 = vadd.f32 0.0, %v1753
      %v1755 = vpop.f32.mrb[0].mxu0
      %1756 = vmatprep.mubr.bf16.mxu0 0
      %1757 = vmatmul.mubr.bf16.gmra.mrb[0].mxu0 %v1628
      %v1758 = vpop.f32.mrb[0].mxu0
      %v1759 = vadd.f32 0.0, %v1758
      %v1760 = vpop.f32.mrb[0].mxu0
      %v1761 = vpop.f32.mrb[0].mxu0
      %v1762 = vadd.f32 0.0, %v1761
      %v1763 = vpop.f32.mrb[0].mxu0
      %1764 = vmatprep.mubr.bf16.mxu0 0
      %1765 = vmatmul.mubr.bf16.gmra.mrb[0].mxu0 %v1630
      %v1766 = vpop.f32.mrb[0].mxu0
      %v1767 = vadd.f32 0.0, %v1766
      %v1768 = vpop.f32.mrb[0].mxu0
      %v1769 = vpop.f32.mrb[0].mxu0
      %v1770 = vadd.f32 0.0, %v1769
      %v1771 = vpop.f32.mrb[0].mxu0
      %1772 = vmatprep.mubr.bf16.mxu0 0
      %1773 = vmatmul.mubr.bf16.gmra.mrb[0].mxu0 %v1632
      %v1774 = vpop.f32.mrb[0].mxu0
      %v1775 = vadd.f32 0.0, %v1774
      %v1776 = vpop.f32.mrb[0].mxu0
      %v1777 = vpop.f32.mrb[0].mxu0
      %v1778 = vadd.f32 0.0, %v1777
      %v1779 = vpop.f32.mrb[0].mxu0
      %1780 = vmatprep.mubr.bf16.mxu0 0
      %1781 = vmatmul.mubr.bf16.gmra.mrb[0].mxu0 %v1634
      %v1782 = vpop.f32.mrb[0].mxu0
      %v1783 = vadd.f32 0.0, %v1782
      %v1784 = vpop.f32.mrb[0].mxu0
      %v1785 = vpop.f32.mrb[0].mxu0
      %v1786 = vadd.f32 0.0, %v1785
      %v1787 = vpop.f32.mrb[0].mxu0
      %1788 = vmatprep.mubr.bf16.mxu0 0
      %1789 = vmatmul.mubr.bf16.gmra.mrb[0].mxu0 %v1636
      %v1790 = vpop.f32.mrb[0].mxu0
      %v1791 = vadd.f32 0.0, %v1790
      %v1792 = vpop.f32.mrb[0].mxu0
      %v1793 = vpop.f32.mrb[0].mxu0
      %v1794 = vadd.f32 0.0, %v1793
      %v1795 = vpop.f32.mrb[0].mxu0
      %1796 = vmatprep.mubr.bf16.mxu0 0
      %1797 = vmatmul.mubr.bf16.gmra.mrb[0].mxu0 %v1638
      %v1798 = vpop.f32.mrb[0].mxu0
      %v1799 = vadd.f32 0.0, %v1798
      %v1800 = vpop.f32.mrb[0].mxu0
      %v1801 = vpop.f32.mrb[0].mxu0
      %v1802 = vadd.f32 0.0, %v1801
      %v1803 = vpop.f32.mrb[0].mxu0
      %1804 = vdwg.mxu0
      %v1805 = vpack.c.bf16 %v1682, %v1679
      %v1806 = vpack.c.bf16 %v1690, %v1687
      %v1807 = vpack.c.bf16 %v1698, %v1695
      %v1808 = vpack.c.bf16 %v1706, %v1703
      %v1809 = vpack.c.bf16 %v1714, %v1711
      %v1810 = vpack.c.bf16 %v1722, %v1719
      %v1811 = vpack.c.bf16 %v1730, %v1727
      %v1812 = vpack.c.bf16 %v1738, %v1735
      %v1813 = vpack.c.bf16 %v1746, %v1743
      %v1814 = vpack.c.bf16 %v1754, %v1751
      %v1815 = vpack.c.bf16 %v1762, %v1759
      %v1816 = vpack.c.bf16 %v1770, %v1767
      %v1817 = vpack.c.bf16 %v1778, %v1775
      %v1818 = vpack.c.bf16 %v1786, %v1783
      %v1819 = vpack.c.bf16 %v1794, %v1791
      %v1820 = vpack.c.bf16 %v1802, %v1799
      %v1837 = vunpack.c.l.b16 %v1805
      %v1838 = vunpack.c.h.b16 %v1805
      %v1839 = vunpack.c.l.b16 %v1806
      %v1840 = vunpack.c.h.b16 %v1806
      %v1841 = vunpack.c.l.b16 %v1807
      %v1842 = vunpack.c.h.b16 %v1807
      %v1843 = vunpack.c.l.b16 %v1808
      %v1844 = vunpack.c.h.b16 %v1808
      %v1845 = vunpack.c.l.b16 %v1809
      %v1846 = vunpack.c.h.b16 %v1809
      %v1847 = vunpack.c.l.b16 %v1810
      %v1848 = vunpack.c.h.b16 %v1810
      %v1849 = vunpack.c.l.b16 %v1811
      %v1850 = vunpack.c.h.b16 %v1811
      %v1851 = vunpack.c.l.b16 %v1812
      %v1852 = vunpack.c.h.b16 %v1812
      %v1853 = vunpack.c.l.b16 %v1813
      %v1854 = vunpack.c.h.b16 %v1813
      %v1855 = vunpack.c.l.b16 %v1814
      %v1856 = vunpack.c.h.b16 %v1814
      %v1857 = vunpack.c.l.b16 %v1815
      %v1858 = vunpack.c.h.b16 %v1815
      %v1859 = vunpack.c.l.b16 %v1816
      %v1860 = vunpack.c.h.b16 %v1816
      %v1861 = vunpack.c.l.b16 %v1817
      %v1862 = vunpack.c.h.b16 %v1817
      %v1863 = vunpack.c.l.b16 %v1818
      %v1864 = vunpack.c.h.b16 %v1818
      %v1865 = vunpack.c.l.b16 %v1819
      %v1866 = vunpack.c.h.b16 %v1819
      %v1867 = vunpack.c.l.b16 %v1820
      %v1868 = vunpack.c.h.b16 %v1820
      %v1869 = vpack.c.b16 %v1837, %v1837
      %v1870 = vpack.c.b16 %v1838, %v1838
      %v1871 = vpack.c.b16 %v1839, %v1839
      %v1872 = vpack.c.b16 %v1840, %v1840
      %v1873 = vpack.c.b16 %v1841, %v1841
      %v1874 = vpack.c.b16 %v1842, %v1842
      %v1875 = vpack.c.b16 %v1843, %v1843
      %v1876 = vpack.c.b16 %v1844, %v1844
      %v1877 = vpack.c.b16 %v1845, %v1845
      %v1878 = vpack.c.b16 %v1846, %v1846
      %v1879 = vpack.c.b16 %v1847, %v1847
      %v1880 = vpack.c.b16 %v1848, %v1848
      %v1881 = vpack.c.b16 %v1849, %v1849
      %v1882 = vpack.c.b16 %v1850, %v1850
      %v1883 = vpack.c.b16 %v1851, %v1851
      %v1884 = vpack.c.b16 %v1852, %v1852
      %v1885 = vpack.c.b16 %v1853, %v1853
      %v1886 = vpack.c.b16 %v1854, %v1854
      %v1887 = vpack.c.b16 %v1855, %v1855
      %v1888 = vpack.c.b16 %v1856, %v1856
      %v1889 = vpack.c.b16 %v1857, %v1857
      %v1890 = vpack.c.b16 %v1858, %v1858
      %v1891 = vpack.c.b16 %v1859, %v1859
      %v1892 = vpack.c.b16 %v1860, %v1860
      %v1893 = vpack.c.b16 %v1861, %v1861
      %v1894 = vpack.c.b16 %v1862, %v1862
      %v1895 = vpack.c.b16 %v1863, %v1863
      %v1896 = vpack.c.b16 %v1864, %v1864
      %v1897 = vpack.c.b16 %v1865, %v1865
      %v1898 = vpack.c.b16 %v1866, %v1866
      %v1899 = vpack.c.b16 %v1867, %v1867
      %v1900 = vpack.c.b16 %v1868, %v1868
      %1933 = vst [vmem:[%s201] sm:$0xf] %v1869
      %1934 = vst [vmem:[%s201 + $0x4] sm:$0xf] %v1870
      %1935 = vst [vmem:[%s201 + $0x8] sm:$0xf] %v1871
      %1936 = vst [vmem:[%s201 + $0xc] sm:$0xf] %v1872
      %1937 = vst [vmem:[%s201 + $0x10] sm:$0xf] %v1873
      %1938 = vst [vmem:[%s201 + $0x14] sm:$0xf] %v1874
      %1939 = vst [vmem:[%s201 + $0x18] sm:$0xf] %v1875
      %1940 = vst [vmem:[%s201 + $0x1c] sm:$0xf] %v1876
      %1941 = vst [vmem:[%s201 + $0x20] sm:$0xf] %v1877
      %1942 = vst [vmem:[%s201 + $0x24] sm:$0xf] %v1878
      %1943 = vst [vmem:[%s201 + $0x28] sm:$0xf] %v1879
      %1944 = vst [vmem:[%s201 + $0x2c] sm:$0xf] %v1880
      %1945 = vst [vmem:[%s201 + $0x30] sm:$0xf] %v1881
      %1946 = vst [vmem:[%s201 + $0x34] sm:$0xf] %v1882
      %1947 = vst [vmem:[%s201 + $0x38] sm:$0xf] %v1883
      %1948 = vst [vmem:[%s201 + $0x3c] sm:$0xf] %v1884
      %1949 = vst [vmem:[%s201 + $0x40] sm:$0xf] %v1885
      %1950 = vst [vmem:[%s201 + $0x44] sm:$0xf] %v1886
      %1951 = vst [vmem:[%s201 + $0x48] sm:$0xf] %v1887
      %1952 = vst [vmem:[%s201 + $0x4c] sm:$0xf] %v1888
      %1953 = vst [vmem:[%s201 + $0x50] sm:$0xf] %v1889
      %1954 = vst [vmem:[%s201 + $0x54] sm:$0xf] %v1890
      %1955 = vst [vmem:[%s201 + $0x58] sm:$0xf] %v1891
      %1956 = vst [vmem:[%s201 + $0x5c] sm:$0xf] %v1892
      %1957 = vst [vmem:[%s201 + $0x60] sm:$0xf] %v1893
      %1958 = vst [vmem:[%s201 + $0x64] sm:$0xf] %v1894
      %1959 = vst [vmem:[%s201 + $0x68] sm:$0xf] %v1895
      %1960 = vst [vmem:[%s201 + $0x6c] sm:$0xf] %v1896
      %1961 = vst [vmem:[%s201 + $0x70] sm:$0xf] %v1897
      %1962 = vst [vmem:[%s201 + $0x74] sm:$0xf] %v1898
      %1963 = vst [vmem:[%s201 + $0x78] sm:$0xf] %v1899
      %1964 = vst [vmem:[%s201 + $0x7c] sm:$0xf] %v1900
      %v1965 = vadd.f32 %v1679, %v1682
      %v1966 = vadd.f32 %v1965, %v1687
      %v1967 = vadd.f32 %v1966, %v1690
      %v1968 = vadd.f32 %v1967, %v1695
      %v1969 = vadd.f32 %v1968, %v1698
      %v1970 = vadd.f32 %v1969, %v1703
      %v1971 = vadd.f32 %v1970, %v1706
      %v1972 = vadd.f32 %v1971, %v1711
      %v1973 = vadd.f32 %v1972, %v1714
      %v1974 = vadd.f32 %v1973, %v1719
      %v1975 = vadd.f32 %v1974, %v1722
      %v1976 = vadd.f32 %v1975, %v1727
      %v1977 = vadd.f32 %v1976, %v1730
      %v1978 = vadd.f32 %v1977, %v1735
      %v1979 = vadd.f32 %v1978, %v1738
      %v1980 = vadd.f32 %v1979, %v1743
      %v1981 = vadd.f32 %v1980, %v1746
      %v1982 = vadd.f32 %v1981, %v1751
      %v1983 = vadd.f32 %v1982, %v1754
      %v1984 = vadd.f32 %v1983, %v1759
      %v1985 = vadd.f32 %v1984, %v1762
      %v1986 = vadd.f32 %v1985, %v1767
      %v1987 = vadd.f32 %v1986, %v1770
      %v1988 = vadd.f32 %v1987, %v1775
      %v1989 = vadd.f32 %v1988, %v1778
      %v1990 = vadd.f32 %v1989, %v1783
      %v1991 = vadd.f32 %v1990, %v1786
      %v1992 = vadd.f32 %v1991, %v1791
      %v1993 = vadd.f32 %v1992, %v1794
      %v1994 = vadd.f32 %v1993, %v1799
      %v1995 = vadd.f32 %v1994, %v1802
      %v1996 = vrot.slane %v1995, 4
      %v1997 = vadd.f32 %v1995, %v1996
      %v1998 = vrot.slane %v1997, 2
      %v1999 = vadd.f32 %v1997, %v1998
      %v2000 = vrot.slane %v1999, 1
      %v2001 = vadd.f32 %v1999, %v2000
      %v2002 = vmul.f32 %v1679, %v1679
      %v2003 = vmul.f32 %v1682, %v1682
      %v2004 = vmul.f32 %v1687, %v1687
      %v2005 = vmul.f32 %v1690, %v1690
      %v2006 = vmul.f32 %v1695, %v1695
      %v2007 = vmul.f32 %v1698, %v1698
      %v2008 = vmul.f32 %v1703, %v1703
      %v2009 = vmul.f32 %v1706, %v1706
      %v2010 = vmul.f32 %v1711, %v1711
      %v2011 = vmul.f32 %v1714, %v1714
      %v2012 = vmul.f32 %v1719, %v1719
      %v2013 = vmul.f32 %v1722, %v1722
      %v2014 = vmul.f32 %v1727, %v1727
      %v2015 = vmul.f32 %v1730, %v1730
      %v2016 = vmul.f32 %v1735, %v1735
      %v2017 = vmul.f32 %v1738, %v1738
      %v2018 = vmul.f32 %v1743, %v1743
      %v2019 = vmul.f32 %v1746, %v1746
      %v2020 = vmul.f32 %v1751, %v1751
      %v2021 = vmul.f32 %v1754, %v1754
      %v2022 = vmul.f32 %v1759, %v1759
      %v2023 = vmul.f32 %v1762, %v1762
      %v2024 = vmul.f32 %v1767, %v1767
      %v2025 = vmul.f32 %v1770, %v1770
      %v2026 = vmul.f32 %v1775, %v1775
      %v2027 = vmul.f32 %v1778, %v1778
      %v2028 = vmul.f32 %v1783, %v1783
      %v2029 = vmul.f32 %v1786, %v1786
      %v2030 = vmul.f32 %v1791, %v1791
      %v2031 = vmul.f32 %v1794, %v1794
      %v2032 = vmul.f32 %v1799, %v1799
      %v2033 = vmul.f32 %v1802, %v1802
      %v2034 = vadd.f32 %v2002, %v2003
      %v2035 = vadd.f32 %v2034, %v2004
      %v2036 = vadd.f32 %v2035, %v2005
      %v2037 = vadd.f32 %v2036, %v2006
      %v2038 = vadd.f32 %v2037, %v2007
      %v2039 = vadd.f32 %v2038, %v2008
      %v2040 = vadd.f32 %v2039, %v2009
      %v2041 = vadd.f32 %v2040, %v2010
      %v2042 = vadd.f32 %v2041, %v2011
      %v2043 = vadd.f32 %v2042, %v2012
      %v2044 = vadd.f32 %v2043, %v2013
      %v2045 = vadd.f32 %v2044, %v2014
      %v2046 = vadd.f32 %v2045, %v2015
      %v2047 = vadd.f32 %v2046, %v2016
      %v2048 = vadd.f32 %v2047, %v2017
      %v2049 = vadd.f32 %v2048, %v2018
      %v2050 = vadd.f32 %v2049, %v2019
      %v2051 = vadd.f32 %v2050, %v2020
      %v2052 = vadd.f32 %v2051, %v2021
      %v2053 = vadd.f32 %v2052, %v2022
      %v2054 = vadd.f32 %v2053, %v2023
      %v2055 = vadd.f32 %v2054, %v2024
      %v2056 = vadd.f32 %v2055, %v2025
      %v2057 = vadd.f32 %v2056, %v2026
      %v2058 = vadd.f32 %v2057, %v2027
      %v2059 = vadd.f32 %v2058, %v2028
      %v2060 = vadd.f32 %v2059, %v2029
      %v2061 = vadd.f32 %v2060, %v2030
      %v2062 = vadd.f32 %v2061, %v2031
      %v2063 = vadd.f32 %v2062, %v2032
      %v2064 = vadd.f32 %v2063, %v2033
      %v2065 = vrot.slane %v2064, 4
      %v2066 = vadd.f32 %v2064, %v2065
      %v2067 = vrot.slane %v2066, 2
      %v2068 = vadd.f32 %v2066, %v2067
      %v2069 = vrot.slane %v2068, 1
      %v2070 = vadd.f32 %v2068, %v2069
      %v2071 = vld [vmem:[%s206] sm:$0x3]
      %vm2072 = vcmask 1040384
      %v2073 = vsel %vm2072, %v2001, %v2070
      %v2074 = vadd.f32 %v2071, %v2073
      %2075 = vst [vmem:[%s206] sm:$0x3] %v2074
      %s2076 = smul.u32 16, %s20
      %p2077 = scmp.lt.s32.totalorder %s19, 1
      %s2078 = scalar_select %p2077, %s19, 1
      %p2079 = scmp.lt.s32.totalorder %s2076, 15
      %s2080 = scalar_select %p2079, %s2076, 15
      %s2081 = smul.addr %s2080, 2
      %s2082 = smul.addr %s2078, 32
      %s2083 = sadd.s32 %s2081, %s2082
      %s2084 = smul.addr %s2083, 4
      %s2085 = scalar_lea.vmem %s2, %s2084
      %p2086 = scmp.lt.s32.totalorder %s19, 1
      %s2087 = scalar_select %p2086, %s19, 1
      %s2088 = smul.addr %s2087, 2
      %s2089 = scalar_lea.vmem %s3, %s2088
      // Predicated region
      $region33: #{up_conv_forward.1} parent=27 // pred_check
        %p2090 = pneg %p94
      $region34: #{up_conv_forward.1} parent=27 // pred_check_branch
        %2092 = sbr.rel (%p2090) target = $region36
      $region35: #{up_conv_forward.1} parent=27 // pred_region
        %s2093 = smul.u32 16, %s20
      $region36: #{up_conv_forward.1} parent=27 // pred_fallthru
        _
      // Predicated region
      $region37: #{up_conv_forward.1} parent=27 // pred_check
        %p2094 = pneg %p120
      $region38: #{up_conv_forward.1} parent=27 // pred_check_branch
        %2096 = sbr.rel (%p2094) target = $region40
      $region39: #{up_conv_forward.1} parent=27 // pred_region
        _
      $region40: #{up_conv_forward.1} parent=27 // pred_fallthru
        _
    $region28: #{up_conv_forward.1} parent=5 // pred_fallthru
      _
    %p2097 = scmp.le.s32.totalorder 2, %s10
    // Predicated region
    $region41: #{up_conv_forward.1} parent=5 // pred_check
      %p2098 = pneg %p2097
    $region42: #{up_conv_forward.1} parent=5 // pred_check_branch
      %2100 = sbr.rel (%p2098) target = $region44
    $region43: #{up_conv_forward.1} parent=5 // pred_region
      %s2101 = ssub.s32 %s10, 2
      // Predicated region
      $region45: #{up_conv_forward.1} parent=43 // pred_check
        %p2102 = pneg %p100
      $region46: #{up_conv_forward.1} parent=43 // pred_check_branch
        %2104 = sbr.rel (%p2102) target = $region48
      $region47: #{up_conv_forward.1} parent=43 // pred_region
        %s2105 = smul.u32 16, %s22
        %p2106 = scmp.lt.s32.totalorder %s21, 1
        %s2107 = scalar_select %p2106, %s21, 1
        %p2108 = scmp.lt.s32.totalorder %s2105, 15
        %s2109 = scalar_select %p2108, %s2105, 15
        %s2110 = smul.addr %s2109, 2
        %s2111 = smul.addr %s2107, 32
        %s2112 = sadd.s32 %s2110, %s2111
        %s2113 = smul.addr %s2112, 4
        %s2114 = scalar_lea.vmem %s2, %s2113
      $region48: #{up_conv_forward.1} parent=43 // pred_fallthru
        _
      // Predicated region
      $region49: #{up_conv_forward.1} parent=43 // pred_check
        %p2115 = pneg %p126
      $region50: #{up_conv_forward.1} parent=43 // pred_check_branch
        %2117 = sbr.rel (%p2115) target = $region52
      $region51: #{up_conv_forward.1} parent=43 // pred_region
        %p2118 = scmp.lt.s32.totalorder %s21, 1
        %s2119 = scalar_select %p2118, %s21, 1
        %s2120 = smul.addr %s2119, 2
        %s2121 = scalar_lea.vmem %s3, %s2120
      $region52: #{up_conv_forward.1} parent=43 // pred_fallthru
        _
    $region44: #{up_conv_forward.1} parent=5 // pred_fallthru
      _
  $region6: #{up_conv_forward.1} parent=0 // loop_footer
    %s14 = sadd.s32 1, %s10
  $region7: #{up_conv_forward.1} parent=0 // loop_footer_branch
    %9 = sbr.rel target = $region3
  $region8: #{up_conv_forward.1} parent=0 // loop_exit
    _

</llo_original>
